<compile_context>
chip_gen: v7x
topology: tpu7x:2x2x1
jax: 0.10.0
libtpu: 0.0.40
codegen_flags: <defaults>
</compile_context>

<pallas_src>
import jax
import jax.numpy as jnp
from jax.experimental import pallas as pl
from jax.experimental.pallas import tpu as pltpu

# ----------------------------- configuration --------------------------------
# Packing below is specific to this (default UMLS) edge schema.
EDGE_TYPES = (
    ("cui", "umls", "cui"),      # cui -> cui
    ("aui", "in_cui", "cui"),    # aui -> cui
    ("cui", "has_aui", "aui"),   # cui -> aui
)
EMBED_DIM = 32
NUM_LAYERS = 2      # graph_num_layers
NUM_FILTERS = 2     # graph_num_filters


# ------------------------------ Pallas kernel --------------------------------
def _gnn_kernel(x_cui_ref, x_aui_ref,
                adj_uu_ref, adj_ac_ref, adj_ca_ref,
                inv_uu_ref, inv_ac_ref, inv_ca_ref,
                w_cui_ref, b_cui_ref, w_aui_ref, b_aui_ref,
                out_cui_ref, out_aui_ref):
    """Whole (filter, layer) sweep in one invocation, fully unrolled."""
    f32 = jnp.float32
    d = EMBED_DIM

    x_cui = x_cui_ref[...]
    x_aui = x_aui_ref[...]
    # bf16 edge counts (exact small integers) -> f32 for the matmul.
    adj_uu = adj_uu_ref[...].astype(f32)
    adj_ac = adj_ac_ref[...].astype(f32)
    adj_ca = adj_ca_ref[...].astype(f32)
    inv_uu = inv_uu_ref[...]          # (N_cui, 1) f32
    inv_ac = inv_ac_ref[...]          # (N_cui, 1) f32
    inv_ca = inv_ca_ref[...]          # (N_aui, 1) f32

    def aggregate(h_cui, h_aui):
        # scatter-mean == (count adjacency @ x_src) scaled by 1/deg (f32, post).
        agg_uu = jnp.dot(adj_uu, h_cui, preferred_element_type=f32) * inv_uu
        agg_ac = jnp.dot(adj_ac, h_aui, preferred_element_type=f32) * inv_ac
        agg_ca = jnp.dot(adj_ca, h_cui, preferred_element_type=f32) * inv_ca
        return agg_uu, agg_ac, agg_ca

    # Layer-0 aggregations are identical for every filter stack: compute once.
    agg0 = aggregate(x_cui, x_aui)

    out_cui = None
    out_aui = None
    for f in range(NUM_FILTERS):                 # static unroll
        h_cui, h_aui = x_cui, x_aui
        aggs = agg0
        for l in range(NUM_LAYERS):              # static unroll
            idx = f * NUM_LAYERS + l
            agg_uu, agg_ac, agg_ca = aggs
            w_c = w_cui_ref[idx]                 # (3D, D)
            w_a = w_aui_ref[idx]                 # (2D, D)
            b_c = b_cui_ref[idx]                 # (1, D)
            b_a = b_aui_ref[idx]                 # (1, D)

            # Fused SAGEConv + HeteroConv('sum'): accumulated K=32 dots
            # (no lane-axis concatenate, no padded-K MXU work).
            new_cui = (jnp.dot(agg_uu, w_c[:d], preferred_element_type=f32)
                       + jnp.dot(agg_ac, w_c[d:2 * d], preferred_element_type=f32)
                       + jnp.dot(h_cui, w_c[2 * d:], preferred_element_type=f32)
                       + b_c)
            new_aui = (jnp.dot(agg_ca, w_a[:d], preferred_element_type=f32)
                       + jnp.dot(h_aui, w_a[d:], preferred_element_type=f32)
                       + b_a)

            if l < NUM_LAYERS - 1:
                # Inter-layer ReLU, then re-aggregate for the next layer.
                h_cui = jnp.maximum(new_cui, 0.0)
                h_aui = jnp.maximum(new_aui, 0.0)
                aggs = aggregate(h_cui, h_aui)
            else:
                h_cui, h_aui = new_cui, new_aui

        # Running max over filter stacks (plain local values).
        out_cui = h_cui if out_cui is None else jnp.maximum(out_cui, h_cui)
        out_aui = h_aui if out_aui is None else jnp.maximum(out_aui, h_aui)

    # TODO(synk): at scale, present lane-dense (N*D/128, 128) output slabs /
    # per-filter outputs for v7x megacore; a single store is fine here.
    out_cui_ref[...] = out_cui
    out_aui_ref[...] = out_aui


# --------------------------------- glue --------------------------------------
def count_adjacency_and_inv_degree(edge_index, n_src, n_dst):
    """Dense edge-count matrix (bf16, exact small ints) + f32 1/deg column."""
    src = edge_index[0]
    dst = edge_index[1]
    counts = jnp.zeros((n_dst, n_src), jnp.float32).at[dst, src].add(1.0)
    deg = jnp.sum(counts, axis=1, keepdims=True)
    inv_deg = 1.0 / jnp.maximum(deg, 1.0)       # isolated dst -> zero aggregation
    return counts.astype(jnp.bfloat16), inv_deg.astype(jnp.float32)


def mean_adjacency(edge_index, n_src, n_dst):
    """f32 row-normalized adjacency (reference path only)."""
    src = edge_index[0]
    dst = edge_index[1]
    a = jnp.zeros((n_dst, n_src), jnp.float32).at[dst, src].add(1.0)
    deg = jnp.sum(a, axis=1, keepdims=True)
    return a / jnp.maximum(deg, 1.0)


def init_params(key, edge_types, d, num_filters, num_layers):
    """One SAGEConv (lin_l with bias, lin_r without) per (filter, layer, edge).

    Weights are kept pre-transposed to [in, out] (== torch weight .T).
    """
    params = {}
    scale = 1.0 / jnp.sqrt(jnp.float32(d))
    for f in range(num_filters):
        for i in range(num_layers):
            for e in edge_types:
                key, k1, k2, k3 = jax.random.split(key, 4)
                w_l = jax.random.normal(k1, (d, d), jnp.float32) * scale  # torch [out, in]
                w_r = jax.random.normal(k2, (d, d), jnp.float32) * scale
                b_l = jax.random.normal(k3, (d,), jnp.float32) * scale
                params[(f, i, e)] = (w_l.T, w_r.T, b_l)                   # pre-transposed
    return params


def pack_params(params):
    """Fused per-(filter*layer) weights for the single-invocation kernel.

    cui dst: W = [Wl_umls; Wl_in_cui; Wr_umls + Wr_in_cui]  (3D, D),  b = b_umls + b_in_cui
    aui dst: W = [Wl_has_aui; Wr_has_aui]                   (2D, D),  b = b_has_aui
    Leading axis is the flattened (filter, layer) index f*NUM_LAYERS + l.
    """
    d = EMBED_DIM
    e_uu, e_ac, e_ca = EDGE_TYPES
    w_cui, b_cui, w_aui, b_aui = [], [], [], []
    for f in range(NUM_FILTERS):
        for i in range(NUM_LAYERS):
            wl_uu, wr_uu, bl_uu = params[(f, i, e_uu)]
            wl_ac, wr_ac, bl_ac = params[(f, i, e_ac)]
            wl_ca, wr_ca, bl_ca = params[(f, i, e_ca)]
            w_cui.append(jnp.concatenate([wl_uu, wl_ac, wr_uu + wr_ac], axis=0))  # (3D, D)
            b_cui.append((bl_uu + bl_ac).reshape(1, d))
            w_aui.append(jnp.concatenate([wl_ca, wr_ca], axis=0))                 # (2D, D)
            b_aui.append(bl_ca.reshape(1, d))
    return (jnp.stack(w_cui), jnp.stack(b_cui),    # (F*L, 3D, D), (F*L, 1, D)
            jnp.stack(w_aui), jnp.stack(b_aui))    # (F*L, 2D, D), (F*L, 1, D)


def umls_gnn_forward(packed_params, x_dict, edge_index_dict):
    w_cui, b_cui, w_aui, b_aui = packed_params
    x_cui = x_dict["cui"]
    x_aui = x_dict["aui"]
    n_cui, d = x_cui.shape
    n_aui, _ = x_aui.shape

    adj_uu, inv_uu = count_adjacency_and_inv_degree(edge_index_dict[EDGE_TYPES[0]], n_cui, n_cui)
    adj_ac, inv_ac = count_adjacency_and_inv_degree(edge_index_dict[EDGE_TYPES[1]], n_aui, n_cui)
    adj_ca, inv_ca = count_adjacency_and_inv_degree(edge_index_dict[EDGE_TYPES[2]], n_cui, n_aui)

    vmem = pl.BlockSpec(memory_space=pltpu.MemorySpace.VMEM)   # whole array, VMEM-resident

    out_cui, out_aui = pl.pallas_call(
        _gnn_kernel,
        out_shape=(
            jax.ShapeDtypeStruct((n_cui, d), jnp.float32),
            jax.ShapeDtypeStruct((n_aui, d), jnp.float32),
        ),
        in_specs=[vmem] * 12,
        out_specs=(vmem, vmem),
    )(x_cui, x_aui, adj_uu, adj_ac, adj_ca,
      inv_uu, inv_ac, inv_ca,
      w_cui, b_cui, w_aui, b_aui)

    return {"cui": out_cui, "aui": out_aui}


# -------------------------- pure-JAX reference -------------------------------
def reference_forward(params, x_dict, edge_index_dict):
    """Unfused f32 reference matching the PyTorch module (per-edge SAGEConv,
    HeteroConv 'sum', inter-layer ReLU, max over filter stacks)."""
    node_counts = {k: v.shape[0] for k, v in x_dict.items()}
    adj = {e: mean_adjacency(ei, node_counts[e[0]], node_counts[e[2]])
           for e, ei in edge_index_dict.items()}
    activations = []
    for f in range(NUM_FILTERS):
        act = dict(x_dict)
        for i in range(NUM_LAYERS):
            per_dst = {}
            for e in EDGE_TYPES:
                src, _, dst = e
                w_l_t, w_r_t, b_l = params[(f, i, e)]
                out = (adj[e] @ act[src]) @ w_l_t + act[dst] @ w_r_t + b_l
                per_dst.setdefault(dst, []).append(out)
            new_act = {}
            for dst, outs in per_dst.items():
                s = jnp.sum(jnp.stack(outs, 0), axis=0)
                if i < NUM_LAYERS - 1:
                    s = jnp.maximum(s, 0.0)
                new_act[dst] = s
            act = new_act
        activations.append(act)
    return {k: jnp.max(jnp.stack([activations[f][k] for f in range(NUM_FILTERS)], 0), axis=0)
            for k in x_dict}


# ---------------------------------- main --------------------------------------
if __name__ == "__main__":
    key = jax.random.PRNGKey(0)
    k_feat_cui, k_feat_aui, k_e1, k_e2, k_e3, k_params = jax.random.split(key, 6)

    n_cui, n_aui = 16, 8
    x_dict = {
        "cui": jax.random.normal(k_feat_cui, (n_cui, EMBED_DIM), jnp.float32),
        "aui": jax.random.normal(k_feat_aui, (n_aui, EMBED_DIM), jnp.float32),
    }

    def rand_edges(k, n_src, n_dst, n_edges):
        ks, kd = jax.random.split(k)
        src = jax.random.randint(ks, (n_edges,), 0, n_src, jnp.int32)
        dst = jax.random.randint(kd, (n_edges,), 0, n_dst, jnp.int32)
        return jnp.stack([src, dst], axis=0)

    edge_index_dict = {
        ("cui", "umls", "cui"): rand_edges(k_e1, n_cui, n_cui, 40),
        ("aui", "in_cui", "cui"): rand_edges(k_e2, n_aui, n_cui, 24),
        ("cui", "has_aui", "aui"): rand_edges(k_e3, n_cui, n_aui, 24),
    }

    params = init_params(k_params, EDGE_TYPES, EMBED_DIM, NUM_FILTERS, NUM_LAYERS)
    packed = pack_params(params)

    out = umls_gnn_forward(packed, x_dict, edge_index_dict)
    out = jax.tree_util.tree_map(jax.block_until_ready, out)

    ref = reference_forward(params, x_dict, edge_index_dict)
    for k in x_dict:
        assert out[k].shape == x_dict[k].shape
        assert jnp.allclose(out[k], ref[k], rtol=1e-3, atol=1e-3), f"mismatch for {k}"

    print("KERNEL_OK")
</pallas_src>

<mosaic_0001>
module attributes {stable_mosaic.version = 11 : i64} {
  func.func @_gnn_kernel(%arg0: memref<16x32xf32, #tpu.memory_space<vmem>>, %arg1: memref<8x32xf32, #tpu.memory_space<vmem>>, %arg2: memref<16x16xbf16, #tpu.memory_space<vmem>>, %arg3: memref<16x8xbf16, #tpu.memory_space<vmem>>, %arg4: memref<8x16xbf16, #tpu.memory_space<vmem>>, %arg5: memref<16x1xf32, #tpu.memory_space<vmem>>, %arg6: memref<16x1xf32, #tpu.memory_space<vmem>>, %arg7: memref<8x1xf32, #tpu.memory_space<vmem>>, %arg8: memref<4x96x32xf32, #tpu.memory_space<vmem>>, %arg9: memref<4x1x32xf32, #tpu.memory_space<vmem>>, %arg10: memref<4x64x32xf32, #tpu.memory_space<vmem>>, %arg11: memref<4x1x32xf32, #tpu.memory_space<vmem>>, %arg12: memref<16x32xf32, #tpu.memory_space<vmem>>, %arg13: memref<8x32xf32, #tpu.memory_space<vmem>>) attributes {dimension_semantics = [], scalar_prefetch = 0 : i64, scratch_operands = 0 : i64, tpu.core_type = #tpu.core_type<tc>} {
    %c0 = arith.constant 0 : index
    %c0_0 = arith.constant 0 : index
    %0 = vector.load %arg0[%c0, %c0_0] : memref<16x32xf32, #tpu.memory_space<vmem>>, vector<16x32xf32>
    %c0_1 = arith.constant 0 : index
    %c0_2 = arith.constant 0 : index
    %1 = vector.load %arg1[%c0_1, %c0_2] : memref<8x32xf32, #tpu.memory_space<vmem>>, vector<8x32xf32>
    %c0_3 = arith.constant 0 : index
    %c0_4 = arith.constant 0 : index
    %2 = vector.load %arg2[%c0_3, %c0_4] : memref<16x16xbf16, #tpu.memory_space<vmem>>, vector<16x16xbf16>
    %3 = arith.extf %2 : vector<16x16xbf16> to vector<16x16xf32>
    %c0_5 = arith.constant 0 : index
    %c0_6 = arith.constant 0 : index
    %4 = vector.load %arg3[%c0_5, %c0_6] : memref<16x8xbf16, #tpu.memory_space<vmem>>, vector<16x8xbf16>
    %5 = arith.extf %4 : vector<16x8xbf16> to vector<16x8xf32>
    %c0_7 = arith.constant 0 : index
    %c0_8 = arith.constant 0 : index
    %6 = vector.load %arg4[%c0_7, %c0_8] : memref<8x16xbf16, #tpu.memory_space<vmem>>, vector<8x16xbf16>
    %7 = arith.extf %6 : vector<8x16xbf16> to vector<8x16xf32>
    %c0_9 = arith.constant 0 : index
    %c0_10 = arith.constant 0 : index
    %8 = vector.load %arg5[%c0_9, %c0_10] : memref<16x1xf32, #tpu.memory_space<vmem>>, vector<16x1xf32>
    %c0_11 = arith.constant 0 : index
    %c0_12 = arith.constant 0 : index
    %9 = vector.load %arg6[%c0_11, %c0_12] : memref<16x1xf32, #tpu.memory_space<vmem>>, vector<16x1xf32>
    %c0_13 = arith.constant 0 : index
    %c0_14 = arith.constant 0 : index
    %10 = vector.load %arg7[%c0_13, %c0_14] : memref<8x1xf32, #tpu.memory_space<vmem>>, vector<8x1xf32>
    %cst = arith.constant dense<0.000000e+00> : vector<16x32xf32>
    %11 = tpu.matmul %3, %0, %cst {dimension_numbers = #tpu.dot_dimension_numbers<[1], [0], [0], [1], [0, 0, 1, 1], [], []>} : vector<16x16xf32>, vector<16x32xf32>, vector<16x32xf32> -> vector<16x32xf32>
    %12 = vector.broadcast %8 : vector<16x1xf32> to vector<16x32xf32>
    %13 = arith.mulf %11, %12 : vector<16x32xf32>
    %cst_15 = arith.constant dense<0.000000e+00> : vector<16x32xf32>
    %14 = tpu.matmul %5, %1, %cst_15 {dimension_numbers = #tpu.dot_dimension_numbers<[1], [0], [0], [1], [0, 0, 1, 1], [], []>} : vector<16x8xf32>, vector<8x32xf32>, vector<16x32xf32> -> vector<16x32xf32>
    %15 = vector.broadcast %9 : vector<16x1xf32> to vector<16x32xf32>
    %16 = arith.mulf %14, %15 : vector<16x32xf32>
    %cst_16 = arith.constant dense<0.000000e+00> : vector<8x32xf32>
    %17 = tpu.matmul %7, %0, %cst_16 {dimension_numbers = #tpu.dot_dimension_numbers<[1], [0], [0], [1], [0, 0, 1, 1], [], []>} : vector<8x16xf32>, vector<16x32xf32>, vector<8x32xf32> -> vector<8x32xf32>
    %18 = vector.broadcast %10 : vector<8x1xf32> to vector<8x32xf32>
    %19 = arith.mulf %17, %18 : vector<8x32xf32>
    %c0_17 = arith.constant 0 : index
    %c0_18 = arith.constant 0 : index
    %c0_19 = arith.constant 0 : index
    %20 = vector.load %arg8[%c0_17, %c0_18, %c0_19] : memref<4x96x32xf32, #tpu.memory_space<vmem>>, vector<1x96x32xf32>
    %21 = vector.shape_cast %20 : vector<1x96x32xf32> to vector<96x32xf32>
    %c0_20 = arith.constant 0 : index
    %c0_21 = arith.constant 0 : index
    %c0_22 = arith.constant 0 : index
    %22 = vector.load %arg10[%c0_20, %c0_21, %c0_22] : memref<4x64x32xf32, #tpu.memory_space<vmem>>, vector<1x64x32xf32>
    %23 = vector.shape_cast %22 : vector<1x64x32xf32> to vector<64x32xf32>
    %c0_23 = arith.constant 0 : index
    %c0_24 = arith.constant 0 : index
    %c0_25 = arith.constant 0 : index
    %24 = vector.load %arg9[%c0_23, %c0_24, %c0_25] : memref<4x1x32xf32, #tpu.memory_space<vmem>>, vector<1x1x32xf32>
    %25 = vector.shape_cast %24 : vector<1x1x32xf32> to vector<1x32xf32>
    %c0_26 = arith.constant 0 : index
    %c0_27 = arith.constant 0 : index
    %c0_28 = arith.constant 0 : index
    %26 = vector.load %arg11[%c0_26, %c0_27, %c0_28] : memref<4x1x32xf32, #tpu.memory_space<vmem>>, vector<1x1x32xf32>
    %27 = vector.shape_cast %26 : vector<1x1x32xf32> to vector<1x32xf32>
    %28 = vector.extract_strided_slice %21 {offsets = [0, 0], sizes = [32, 32], strides = [1, 1]} : vector<96x32xf32> to vector<32x32xf32>
    %cst_29 = arith.constant dense<0.000000e+00> : vector<16x32xf32>
    %29 = tpu.matmul %13, %28, %cst_29 {dimension_numbers = #tpu.dot_dimension_numbers<[1], [0], [0], [1], [0, 0, 1, 1], [], []>} : vector<16x32xf32>, vector<32x32xf32>, vector<16x32xf32> -> vector<16x32xf32>
    %30 = vector.extract_strided_slice %21 {offsets = [32, 0], sizes = [32, 32], strides = [1, 1]} : vector<96x32xf32> to vector<32x32xf32>
    %cst_30 = arith.constant dense<0.000000e+00> : vector<16x32xf32>
    %31 = tpu.matmul %16, %30, %cst_30 {dimension_numbers = #tpu.dot_dimension_numbers<[1], [0], [0], [1], [0, 0, 1, 1], [], []>} : vector<16x32xf32>, vector<32x32xf32>, vector<16x32xf32> -> vector<16x32xf32>
    %32 = arith.addf %29, %31 : vector<16x32xf32>
    %33 = vector.extract_strided_slice %21 {offsets = [64, 0], sizes = [32, 32], strides = [1, 1]} : vector<96x32xf32> to vector<32x32xf32>
    %cst_31 = arith.constant dense<0.000000e+00> : vector<16x32xf32>
    %34 = tpu.matmul %0, %33, %cst_31 {dimension_numbers = #tpu.dot_dimension_numbers<[1], [0], [0], [1], [0, 0, 1, 1], [], []>} : vector<16x32xf32>, vector<32x32xf32>, vector<16x32xf32> -> vector<16x32xf32>
    %35 = arith.addf %32, %34 : vector<16x32xf32>
    %36 = vector.broadcast %25 : vector<1x32xf32> to vector<16x32xf32>
    %37 = arith.addf %35, %36 : vector<16x32xf32>
    %38 = vector.extract_strided_slice %23 {offsets = [0, 0], sizes = [32, 32], strides = [1, 1]} : vector<64x32xf32> to vector<32x32xf32>
    %cst_32 = arith.constant dense<0.000000e+00> : vector<8x32xf32>
    %39 = tpu.matmul %19, %38, %cst_32 {dimension_numbers = #tpu.dot_dimension_numbers<[1], [0], [0], [1], [0, 0, 1, 1], [], []>} : vector<8x32xf32>, vector<32x32xf32>, vector<8x32xf32> -> vector<8x32xf32>
    %40 = vector.extract_strided_slice %23 {offsets = [32, 0], sizes = [32, 32], strides = [1, 1]} : vector<64x32xf32> to vector<32x32xf32>
    %cst_33 = arith.constant dense<0.000000e+00> : vector<8x32xf32>
    %41 = tpu.matmul %1, %40, %cst_33 {dimension_numbers = #tpu.dot_dimension_numbers<[1], [0], [0], [1], [0, 0, 1, 1], [], []>} : vector<8x32xf32>, vector<32x32xf32>, vector<8x32xf32> -> vector<8x32xf32>
    %42 = arith.addf %39, %41 : vector<8x32xf32>
    %43 = vector.broadcast %27 : vector<1x32xf32> to vector<8x32xf32>
    %44 = arith.addf %42, %43 : vector<8x32xf32>
    %cst_34 = arith.constant 0.000000e+00 : f32
    %45 = vector.broadcast %cst_34 : f32 to vector<16x32xf32>
    %46 = arith.maximumf %37, %45 : vector<16x32xf32>
    %cst_35 = arith.constant 0.000000e+00 : f32
    %47 = vector.broadcast %cst_35 : f32 to vector<8x32xf32>
    %48 = arith.maximumf %44, %47 : vector<8x32xf32>
    %cst_36 = arith.constant dense<0.000000e+00> : vector<16x32xf32>
    %49 = tpu.matmul %3, %46, %cst_36 {dimension_numbers = #tpu.dot_dimension_numbers<[1], [0], [0], [1], [0, 0, 1, 1], [], []>} : vector<16x16xf32>, vector<16x32xf32>, vector<16x32xf32> -> vector<16x32xf32>
    %50 = vector.broadcast %8 : vector<16x1xf32> to vector<16x32xf32>
    %51 = arith.mulf %49, %50 : vector<16x32xf32>
    %cst_37 = arith.constant dense<0.000000e+00> : vector<16x32xf32>
    %52 = tpu.matmul %5, %48, %cst_37 {dimension_numbers = #tpu.dot_dimension_numbers<[1], [0], [0], [1], [0, 0, 1, 1], [], []>} : vector<16x8xf32>, vector<8x32xf32>, vector<16x32xf32> -> vector<16x32xf32>
    %53 = vector.broadcast %9 : vector<16x1xf32> to vector<16x32xf32>
    %54 = arith.mulf %52, %53 : vector<16x32xf32>
    %cst_38 = arith.constant dense<0.000000e+00> : vector<8x32xf32>
    %55 = tpu.matmul %7, %46, %cst_38 {dimension_numbers = #tpu.dot_dimension_numbers<[1], [0], [0], [1], [0, 0, 1, 1], [], []>} : vector<8x16xf32>, vector<16x32xf32>, vector<8x32xf32> -> vector<8x32xf32>
    %56 = vector.broadcast %10 : vector<8x1xf32> to vector<8x32xf32>
    %57 = arith.mulf %55, %56 : vector<8x32xf32>
    %c1 = arith.constant 1 : index
    %c0_39 = arith.constant 0 : index
    %c0_40 = arith.constant 0 : index
    %58 = vector.load %arg8[%c1, %c0_39, %c0_40] : memref<4x96x32xf32, #tpu.memory_space<vmem>>, vector<1x96x32xf32>
    %59 = vector.shape_cast %58 : vector<1x96x32xf32> to vector<96x32xf32>
    %c1_41 = arith.constant 1 : index
    %c0_42 = arith.constant 0 : index
    %c0_43 = arith.constant 0 : index
    %60 = vector.load %arg10[%c1_41, %c0_42, %c0_43] : memref<4x64x32xf32, #tpu.memory_space<vmem>>, vector<1x64x32xf32>
    %61 = vector.shape_cast %60 : vector<1x64x32xf32> to vector<64x32xf32>
    %c1_44 = arith.constant 1 : index
    %c0_45 = arith.constant 0 : index
    %c0_46 = arith.constant 0 : index
    %62 = vector.load %arg9[%c1_44, %c0_45, %c0_46] : memref<4x1x32xf32, #tpu.memory_space<vmem>>, vector<1x1x32xf32>
    %63 = vector.shape_cast %62 : vector<1x1x32xf32> to vector<1x32xf32>
    %c1_47 = arith.constant 1 : index
    %c0_48 = arith.constant 0 : index
    %c0_49 = arith.constant 0 : index
    %64 = vector.load %arg11[%c1_47, %c0_48, %c0_49] : memref<4x1x32xf32, #tpu.memory_space<vmem>>, vector<1x1x32xf32>
    %65 = vector.shape_cast %64 : vector<1x1x32xf32> to vector<1x32xf32>
    %66 = vector.extract_strided_slice %59 {offsets = [0, 0], sizes = [32, 32], strides = [1, 1]} : vector<96x32xf32> to vector<32x32xf32>
    %cst_50 = arith.constant dense<0.000000e+00> : vector<16x32xf32>
    %67 = tpu.matmul %51, %66, %cst_50 {dimension_numbers = #tpu.dot_dimension_numbers<[1], [0], [0], [1], [0, 0, 1, 1], [], []>} : vector<16x32xf32>, vector<32x32xf32>, vector<16x32xf32> -> vector<16x32xf32>
    %68 = vector.extract_strided_slice %59 {offsets = [32, 0], sizes = [32, 32], strides = [1, 1]} : vector<96x32xf32> to vector<32x32xf32>
    %cst_51 = arith.constant dense<0.000000e+00> : vector<16x32xf32>
    %69 = tpu.matmul %54, %68, %cst_51 {dimension_numbers = #tpu.dot_dimension_numbers<[1], [0], [0], [1], [0, 0, 1, 1], [], []>} : vector<16x32xf32>, vector<32x32xf32>, vector<16x32xf32> -> vector<16x32xf32>
    %70 = arith.addf %67, %69 : vector<16x32xf32>
    %71 = vector.extract_strided_slice %59 {offsets = [64, 0], sizes = [32, 32], strides = [1, 1]} : vector<96x32xf32> to vector<32x32xf32>
    %cst_52 = arith.constant dense<0.000000e+00> : vector<16x32xf32>
    %72 = tpu.matmul %46, %71, %cst_52 {dimension_numbers = #tpu.dot_dimension_numbers<[1], [0], [0], [1], [0, 0, 1, 1], [], []>} : vector<16x32xf32>, vector<32x32xf32>, vector<16x32xf32> -> vector<16x32xf32>
    %73 = arith.addf %70, %72 : vector<16x32xf32>
    %74 = vector.broadcast %63 : vector<1x32xf32> to vector<16x32xf32>
    %75 = arith.addf %73, %74 : vector<16x32xf32>
    %76 = vector.extract_strided_slice %61 {offsets = [0, 0], sizes = [32, 32], strides = [1, 1]} : vector<64x32xf32> to vector<32x32xf32>
    %cst_53 = arith.constant dense<0.000000e+00> : vector<8x32xf32>
    %77 = tpu.matmul %57, %76, %cst_53 {dimension_numbers = #tpu.dot_dimension_numbers<[1], [0], [0], [1], [0, 0, 1, 1], [], []>} : vector<8x32xf32>, vector<32x32xf32>, vector<8x32xf32> -> vector<8x32xf32>
    %78 = vector.extract_strided_slice %61 {offsets = [32, 0], sizes = [32, 32], strides = [1, 1]} : vector<64x32xf32> to vector<32x32xf32>
    %cst_54 = arith.constant dense<0.000000e+00> : vector<8x32xf32>
    %79 = tpu.matmul %48, %78, %cst_54 {dimension_numbers = #tpu.dot_dimension_numbers<[1], [0], [0], [1], [0, 0, 1, 1], [], []>} : vector<8x32xf32>, vector<32x32xf32>, vector<8x32xf32> -> vector<8x32xf32>
    %80 = arith.addf %77, %79 : vector<8x32xf32>
    %81 = vector.broadcast %65 : vector<1x32xf32> to vector<8x32xf32>
    %82 = arith.addf %80, %81 : vector<8x32xf32>
    %c2 = arith.constant 2 : index
    %c0_55 = arith.constant 0 : index
    %c0_56 = arith.constant 0 : index
    %83 = vector.load %arg8[%c2, %c0_55, %c0_56] : memref<4x96x32xf32, #tpu.memory_space<vmem>>, vector<1x96x32xf32>
    %84 = vector.shape_cast %83 : vector<1x96x32xf32> to vector<96x32xf32>
    %c2_57 = arith.constant 2 : index
    %c0_58 = arith.constant 0 : index
    %c0_59 = arith.constant 0 : index
    %85 = vector.load %arg10[%c2_57, %c0_58, %c0_59] : memref<4x64x32xf32, #tpu.memory_space<vmem>>, vector<1x64x32xf32>
    %86 = vector.shape_cast %85 : vector<1x64x32xf32> to vector<64x32xf32>
    %c2_60 = arith.constant 2 : index
    %c0_61 = arith.constant 0 : index
    %c0_62 = arith.constant 0 : index
    %87 = vector.load %arg9[%c2_60, %c0_61, %c0_62] : memref<4x1x32xf32, #tpu.memory_space<vmem>>, vector<1x1x32xf32>
    %88 = vector.shape_cast %87 : vector<1x1x32xf32> to vector<1x32xf32>
    %c2_63 = arith.constant 2 : index
    %c0_64 = arith.constant 0 : index
    %c0_65 = arith.constant 0 : index
    %89 = vector.load %arg11[%c2_63, %c0_64, %c0_65] : memref<4x1x32xf32, #tpu.memory_space<vmem>>, vector<1x1x32xf32>
    %90 = vector.shape_cast %89 : vector<1x1x32xf32> to vector<1x32xf32>
    %91 = vector.extract_strided_slice %84 {offsets = [0, 0], sizes = [32, 32], strides = [1, 1]} : vector<96x32xf32> to vector<32x32xf32>
    %cst_66 = arith.constant dense<0.000000e+00> : vector<16x32xf32>
    %92 = tpu.matmul %13, %91, %cst_66 {dimension_numbers = #tpu.dot_dimension_numbers<[1], [0], [0], [1], [0, 0, 1, 1], [], []>} : vector<16x32xf32>, vector<32x32xf32>, vector<16x32xf32> -> vector<16x32xf32>
    %93 = vector.extract_strided_slice %84 {offsets = [32, 0], sizes = [32, 32], strides = [1, 1]} : vector<96x32xf32> to vector<32x32xf32>
    %cst_67 = arith.constant dense<0.000000e+00> : vector<16x32xf32>
    %94 = tpu.matmul %16, %93, %cst_67 {dimension_numbers = #tpu.dot_dimension_numbers<[1], [0], [0], [1], [0, 0, 1, 1], [], []>} : vector<16x32xf32>, vector<32x32xf32>, vector<16x32xf32> -> vector<16x32xf32>
    %95 = arith.addf %92, %94 : vector<16x32xf32>
    %96 = vector.extract_strided_slice %84 {offsets = [64, 0], sizes = [32, 32], strides = [1, 1]} : vector<96x32xf32> to vector<32x32xf32>
    %cst_68 = arith.constant dense<0.000000e+00> : vector<16x32xf32>
    %97 = tpu.matmul %0, %96, %cst_68 {dimension_numbers = #tpu.dot_dimension_numbers<[1], [0], [0], [1], [0, 0, 1, 1], [], []>} : vector<16x32xf32>, vector<32x32xf32>, vector<16x32xf32> -> vector<16x32xf32>
    %98 = arith.addf %95, %97 : vector<16x32xf32>
    %99 = vector.broadcast %88 : vector<1x32xf32> to vector<16x32xf32>
    %100 = arith.addf %98, %99 : vector<16x32xf32>
    %101 = vector.extract_strided_slice %86 {offsets = [0, 0], sizes = [32, 32], strides = [1, 1]} : vector<64x32xf32> to vector<32x32xf32>
    %cst_69 = arith.constant dense<0.000000e+00> : vector<8x32xf32>
    %102 = tpu.matmul %19, %101, %cst_69 {dimension_numbers = #tpu.dot_dimension_numbers<[1], [0], [0], [1], [0, 0, 1, 1], [], []>} : vector<8x32xf32>, vector<32x32xf32>, vector<8x32xf32> -> vector<8x32xf32>
    %103 = vector.extract_strided_slice %86 {offsets = [32, 0], sizes = [32, 32], strides = [1, 1]} : vector<64x32xf32> to vector<32x32xf32>
    %cst_70 = arith.constant dense<0.000000e+00> : vector<8x32xf32>
    %104 = tpu.matmul %1, %103, %cst_70 {dimension_numbers = #tpu.dot_dimension_numbers<[1], [0], [0], [1], [0, 0, 1, 1], [], []>} : vector<8x32xf32>, vector<32x32xf32>, vector<8x32xf32> -> vector<8x32xf32>
    %105 = arith.addf %102, %104 : vector<8x32xf32>
    %106 = vector.broadcast %90 : vector<1x32xf32> to vector<8x32xf32>
    %107 = arith.addf %105, %106 : vector<8x32xf32>
    %cst_71 = arith.constant 0.000000e+00 : f32
    %108 = vector.broadcast %cst_71 : f32 to vector<16x32xf32>
    %109 = arith.maximumf %100, %108 : vector<16x32xf32>
    %cst_72 = arith.constant 0.000000e+00 : f32
    %110 = vector.broadcast %cst_72 : f32 to vector<8x32xf32>
    %111 = arith.maximumf %107, %110 : vector<8x32xf32>
    %cst_73 = arith.constant dense<0.000000e+00> : vector<16x32xf32>
    %112 = tpu.matmul %3, %109, %cst_73 {dimension_numbers = #tpu.dot_dimension_numbers<[1], [0], [0], [1], [0, 0, 1, 1], [], []>} : vector<16x16xf32>, vector<16x32xf32>, vector<16x32xf32> -> vector<16x32xf32>
    %113 = vector.broadcast %8 : vector<16x1xf32> to vector<16x32xf32>
    %114 = arith.mulf %112, %113 : vector<16x32xf32>
    %cst_74 = arith.constant dense<0.000000e+00> : vector<16x32xf32>
    %115 = tpu.matmul %5, %111, %cst_74 {dimension_numbers = #tpu.dot_dimension_numbers<[1], [0], [0], [1], [0, 0, 1, 1], [], []>} : vector<16x8xf32>, vector<8x32xf32>, vector<16x32xf32> -> vector<16x32xf32>
    %116 = vector.broadcast %9 : vector<16x1xf32> to vector<16x32xf32>
    %117 = arith.mulf %115, %116 : vector<16x32xf32>
    %cst_75 = arith.constant dense<0.000000e+00> : vector<8x32xf32>
    %118 = tpu.matmul %7, %109, %cst_75 {dimension_numbers = #tpu.dot_dimension_numbers<[1], [0], [0], [1], [0, 0, 1, 1], [], []>} : vector<8x16xf32>, vector<16x32xf32>, vector<8x32xf32> -> vector<8x32xf32>
    %119 = vector.broadcast %10 : vector<8x1xf32> to vector<8x32xf32>
    %120 = arith.mulf %118, %119 : vector<8x32xf32>
    %c3 = arith.constant 3 : index
    %c0_76 = arith.constant 0 : index
    %c0_77 = arith.constant 0 : index
    %121 = vector.load %arg8[%c3, %c0_76, %c0_77] : memref<4x96x32xf32, #tpu.memory_space<vmem>>, vector<1x96x32xf32>
    %122 = vector.shape_cast %121 : vector<1x96x32xf32> to vector<96x32xf32>
    %c3_78 = arith.constant 3 : index
    %c0_79 = arith.constant 0 : index
    %c0_80 = arith.constant 0 : index
    %123 = vector.load %arg10[%c3_78, %c0_79, %c0_80] : memref<4x64x32xf32, #tpu.memory_space<vmem>>, vector<1x64x32xf32>
    %124 = vector.shape_cast %123 : vector<1x64x32xf32> to vector<64x32xf32>
    %c3_81 = arith.constant 3 : index
    %c0_82 = arith.constant 0 : index
    %c0_83 = arith.constant 0 : index
    %125 = vector.load %arg9[%c3_81, %c0_82, %c0_83] : memref<4x1x32xf32, #tpu.memory_space<vmem>>, vector<1x1x32xf32>
    %126 = vector.shape_cast %125 : vector<1x1x32xf32> to vector<1x32xf32>
    %c3_84 = arith.constant 3 : index
    %c0_85 = arith.constant 0 : index
    %c0_86 = arith.constant 0 : index
    %127 = vector.load %arg11[%c3_84, %c0_85, %c0_86] : memref<4x1x32xf32, #tpu.memory_space<vmem>>, vector<1x1x32xf32>
    %128 = vector.shape_cast %127 : vector<1x1x32xf32> to vector<1x32xf32>
    %129 = vector.extract_strided_slice %122 {offsets = [0, 0], sizes = [32, 32], strides = [1, 1]} : vector<96x32xf32> to vector<32x32xf32>
    %cst_87 = arith.constant dense<0.000000e+00> : vector<16x32xf32>
    %130 = tpu.matmul %114, %129, %cst_87 {dimension_numbers = #tpu.dot_dimension_numbers<[1], [0], [0], [1], [0, 0, 1, 1], [], []>} : vector<16x32xf32>, vector<32x32xf32>, vector<16x32xf32> -> vector<16x32xf32>
    %131 = vector.extract_strided_slice %122 {offsets = [32, 0], sizes = [32, 32], strides = [1, 1]} : vector<96x32xf32> to vector<32x32xf32>
    %cst_88 = arith.constant dense<0.000000e+00> : vector<16x32xf32>
    %132 = tpu.matmul %117, %131, %cst_88 {dimension_numbers = #tpu.dot_dimension_numbers<[1], [0], [0], [1], [0, 0, 1, 1], [], []>} : vector<16x32xf32>, vector<32x32xf32>, vector<16x32xf32> -> vector<16x32xf32>
    %133 = arith.addf %130, %132 : vector<16x32xf32>
    %134 = vector.extract_strided_slice %122 {offsets = [64, 0], sizes = [32, 32], strides = [1, 1]} : vector<96x32xf32> to vector<32x32xf32>
    %cst_89 = arith.constant dense<0.000000e+00> : vector<16x32xf32>
    %135 = tpu.matmul %109, %134, %cst_89 {dimension_numbers = #tpu.dot_dimension_numbers<[1], [0], [0], [1], [0, 0, 1, 1], [], []>} : vector<16x32xf32>, vector<32x32xf32>, vector<16x32xf32> -> vector<16x32xf32>
    %136 = arith.addf %133, %135 : vector<16x32xf32>
    %137 = vector.broadcast %126 : vector<1x32xf32> to vector<16x32xf32>
    %138 = arith.addf %136, %137 : vector<16x32xf32>
    %139 = vector.extract_strided_slice %124 {offsets = [0, 0], sizes = [32, 32], strides = [1, 1]} : vector<64x32xf32> to vector<32x32xf32>
    %cst_90 = arith.constant dense<0.000000e+00> : vector<8x32xf32>
    %140 = tpu.matmul %120, %139, %cst_90 {dimension_numbers = #tpu.dot_dimension_numbers<[1], [0], [0], [1], [0, 0, 1, 1], [], []>} : vector<8x32xf32>, vector<32x32xf32>, vector<8x32xf32> -> vector<8x32xf32>
    %141 = vector.extract_strided_slice %124 {offsets = [32, 0], sizes = [32, 32], strides = [1, 1]} : vector<64x32xf32> to vector<32x32xf32>
    %cst_91 = arith.constant dense<0.000000e+00> : vector<8x32xf32>
    %142 = tpu.matmul %111, %141, %cst_91 {dimension_numbers = #tpu.dot_dimension_numbers<[1], [0], [0], [1], [0, 0, 1, 1], [], []>} : vector<8x32xf32>, vector<32x32xf32>, vector<8x32xf32> -> vector<8x32xf32>
    %143 = arith.addf %140, %142 : vector<8x32xf32>
    %144 = vector.broadcast %128 : vector<1x32xf32> to vector<8x32xf32>
    %145 = arith.addf %143, %144 : vector<8x32xf32>
    %146 = arith.maximumf %75, %138 : vector<16x32xf32>
    %147 = arith.maximumf %82, %145 : vector<8x32xf32>
    %c0_92 = arith.constant 0 : index
    %c0_93 = arith.constant 0 : index
    %148 = vector.load %arg12[%c0_92, %c0_93] : memref<16x32xf32, #tpu.memory_space<vmem>>, vector<16x32xf32>
    tpu.vector_store %arg12[%c0_92, %c0_93], %146 {strides = array<i32>} : memref<16x32xf32, #tpu.memory_space<vmem>>, vector<16x32xf32>,
    %c0_94 = arith.constant 0 : index
    %c0_95 = arith.constant 0 : index
    %149 = vector.load %arg13[%c0_94, %c0_95] : memref<8x32xf32, #tpu.memory_space<vmem>>, vector<8x32xf32>
    tpu.vector_store %arg13[%c0_94, %c0_95], %147 {strides = array<i32>} : memref<8x32xf32, #tpu.memory_space<vmem>>, vector<8x32xf32>,
    return
  }
}

</mosaic_0001>

<llo_original>
// kernel: tpu_custom_call.1
$region0: #{tpu_custom_call.1}
  #allocation0 [shape = 'u32[]', space=smem, size = 0x4, offset = 0x4, fixed_abs, tag = 'smem constant byte address 0x4 - core index']
  #allocation1 [shape = 'u32[144,128]{1,0:T(1,128)}', space=vmem, size = 0x12000, scoped, tag = 'internal scratch']
  %s0 = inlined_call_operand.vmem [shape: f32[16,32], index: 0, kind: input, shape index: {}]
  %s1 = inlined_call_operand.vmem [shape: f32[8,32], index: 1, kind: input, shape index: {}]
  %s2 = inlined_call_operand.vmem [shape: bf16[16,16], index: 2, kind: input, shape index: {}]
  %s3 = inlined_call_operand.vmem [shape: bf16[16,8], index: 3, kind: input, shape index: {}]
  %s4 = inlined_call_operand.vmem [shape: bf16[8,16], index: 4, kind: input, shape index: {}]
  %s5 = inlined_call_operand.vmem [shape: f32[16,1], index: 5, kind: input, shape index: {}]
  %s6 = inlined_call_operand.vmem [shape: f32[16,1], index: 6, kind: input, shape index: {}]
  %s7 = inlined_call_operand.vmem [shape: f32[8,1], index: 7, kind: input, shape index: {}]
  %s8 = inlined_call_operand.vmem [shape: f32[4,96,32], index: 8, kind: input, shape index: {}]
  %s9 = inlined_call_operand.vmem [shape: f32[4,1,32], index: 9, kind: input, shape index: {}]
  %s10 = inlined_call_operand.vmem [shape: f32[4,64,32], index: 10, kind: input, shape index: {}]
  %s11 = inlined_call_operand.vmem [shape: f32[4,1,32], index: 11, kind: input, shape index: {}]
  %s12 = inlined_call_operand.hbm [shape: f32[16,32], index: 12, kind: output, shape index: {0}]
  %s13 = inlined_call_operand.hbm [shape: f32[8,32], index: 13, kind: output, shape index: {1}]
  %14 = xla_tuple %s12, %s13
  %s15 = sld [smem:[#allocation0]]
  $region66: #{tpu_custom_call.1} parent=0
    _
  %s17 = ssub.s32 1, %s15
  %s18 = scalar_select 0, %s17, %s15
  $region1: #{tpu_custom_call.1} parent=0
    #allocation2 [shape = 'u8[8192]{0}', space=vmem, size = 0x2000, scoped, tag = 'output window, operand 0, single buffered']
    #allocation3 [shape = 's32[1]{0}', space=sflag, size = 0x4, scoped, tag = 'scoped memory for tpu_custom_call.1']
    #allocation4 [shape = 'u8[4096]{0}', space=vmem, size = 0x1000, scoped, tag = 'output window, operand 1, single buffered']
    #allocation5 [shape = 's32[1]{0}', space=sflag, size = 0x4, scoped, tag = 'scoped memory for tpu_custom_call.1']
    %19 = vsyncpa [#allocation3], 0
    %20 = vsyncpa [#allocation5], 0
    // Predicated region
    $region2: #{tpu_custom_call.1} parent=1 // pred_check
      _
    $region3: #{tpu_custom_call.1} parent=1 // pred_check_branch
      %22 = sbr.rel (0) target = $region5
    $region4: #{tpu_custom_call.1} parent=1 // pred_region
      _
    $region5: #{tpu_custom_call.1} parent=1 // pred_fallthru
      _
    // Predicated region
    $region6: #{tpu_custom_call.1} parent=1 // pred_check
      _
    $region7: #{tpu_custom_call.1} parent=1 // pred_check_branch
      %24 = sbr.rel (0) target = $region9
    $region8: #{tpu_custom_call.1} parent=1 // pred_region
      _
    $region9: #{tpu_custom_call.1} parent=1 // pred_fallthru
      _
    // Predicated region
    $region10: #{tpu_custom_call.1} parent=1 // pred_check
      _
    $region11: #{tpu_custom_call.1} parent=1 // pred_check_branch
      %26 = sbr.rel (0) target = $region13
    $region12: #{tpu_custom_call.1} parent=1 // pred_region
      _
    $region13: #{tpu_custom_call.1} parent=1 // pred_fallthru
      _
    // Predicated region
    $region14: #{tpu_custom_call.1} parent=1 // pred_check
      _
    $region15: #{tpu_custom_call.1} parent=1 // pred_check_branch
      %28 = sbr.rel (0) target = $region17
    $region16: #{tpu_custom_call.1} parent=1 // pred_region
      _
    $region17: #{tpu_custom_call.1} parent=1 // pred_fallthru
      _
    // Predicated region
    $region18: #{tpu_custom_call.1} parent=1 // pred_check
      _
    $region19: #{tpu_custom_call.1} parent=1 // pred_check_branch
      %30 = sbr.rel (0) target = $region21
    $region20: #{tpu_custom_call.1} parent=1 // pred_region
      _
    $region21: #{tpu_custom_call.1} parent=1 // pred_fallthru
      _
    // Predicated region
    $region22: #{tpu_custom_call.1} parent=1 // pred_check
      _
    $region23: #{tpu_custom_call.1} parent=1 // pred_check_branch
      %32 = sbr.rel (0) target = $region25
    $region24: #{tpu_custom_call.1} parent=1 // pred_region
      _
    $region25: #{tpu_custom_call.1} parent=1 // pred_fallthru
      _
    // Predicated region
    $region26: #{tpu_custom_call.1} parent=1 // pred_check
      _
    $region27: #{tpu_custom_call.1} parent=1 // pred_check_branch
      %34 = sbr.rel (0) target = $region29
    $region28: #{tpu_custom_call.1} parent=1 // pred_region
      _
    $region29: #{tpu_custom_call.1} parent=1 // pred_fallthru
      _
    // Predicated region
    $region30: #{tpu_custom_call.1} parent=1 // pred_check
      _
    $region31: #{tpu_custom_call.1} parent=1 // pred_check_branch
      %36 = sbr.rel (0) target = $region33
    $region32: #{tpu_custom_call.1} parent=1 // pred_region
      _
    $region33: #{tpu_custom_call.1} parent=1 // pred_fallthru
      _
    // Predicated region
    $region34: #{tpu_custom_call.1} parent=1 // pred_check
      _
    $region35: #{tpu_custom_call.1} parent=1 // pred_check_branch
      %38 = sbr.rel (0) target = $region37
    $region36: #{tpu_custom_call.1} parent=1 // pred_region
      _
    $region37: #{tpu_custom_call.1} parent=1 // pred_fallthru
      _
    // Predicated region
    $region38: #{tpu_custom_call.1} parent=1 // pred_check
      _
    $region39: #{tpu_custom_call.1} parent=1 // pred_check_branch
      %40 = sbr.rel (0) target = $region41
    $region40: #{tpu_custom_call.1} parent=1 // pred_region
      _
    $region41: #{tpu_custom_call.1} parent=1 // pred_fallthru
      _
    // Predicated region
    $region42: #{tpu_custom_call.1} parent=1 // pred_check
      _
    $region43: #{tpu_custom_call.1} parent=1 // pred_check_branch
      %42 = sbr.rel (0) target = $region45
    $region44: #{tpu_custom_call.1} parent=1 // pred_region
      _
    $region45: #{tpu_custom_call.1} parent=1 // pred_fallthru
      _
    // Predicated region
    $region46: #{tpu_custom_call.1} parent=1 // pred_check
      _
    $region47: #{tpu_custom_call.1} parent=1 // pred_check_branch
      %44 = sbr.rel (0) target = $region49
    $region48: #{tpu_custom_call.1} parent=1 // pred_region
      _
    $region49: #{tpu_custom_call.1} parent=1 // pred_fallthru
      _
    %v45 = vld [vmem:[%s0] sm:$0xff]
    %v46 = vld [vmem:[%s0 + $0x8] sm:$0xff]
    %v47 = vld [vmem:[%s1] sm:$0xff]
    %v48 = vld [vmem:[%s2] sm:$0xf]
    %v49 = vld [vmem:[%s2 + $0x4] sm:$0xf]
    %v50 = vunpack.c.l.bf16 %v48
    %v51 = vunpack.c.l.bf16 %v49
    %v52 = vld [vmem:[%s3] sm:$0xf]
    %v53 = vld [vmem:[%s3 + $0x4] sm:$0xf]
    %v54 = vunpack.c.l.bf16 %v52
    %v55 = vunpack.c.l.bf16 %v53
    %v56 = vld [vmem:[%s4] sm:$0xf]
    %v57 = vunpack.c.l.bf16 %v56
    %v58 = vld [vmem:[%s5] sm:$0xff]
    %v59 = vld [vmem:[%s5 + $0x8] sm:$0xff]
    %v60 = vld [vmem:[%s6] sm:$0xff]
    %v61 = vld [vmem:[%s6 + $0x8] sm:$0xff]
    %v62 = vld [vmem:[%s7] sm:$0xff]
    %vm63 = vcmask 130048
    %v65 = vsel %vm63, %v50, 0
    %v68 = vsel %vm63, %v51, 0
    %70 = vmatprep.subr.mxu0 0.0
    %71 = vmatpush1.msra.mxu0 %v45
    %72 = vmatprep.subr.mxu0 0.0
    %73 = vmatpush1.msra.mxu0 %v46
    %74 = vmatprep.subr.mxu0 0.0
    %75 = vmatpush1.msra.mxu0 0.0
    %76 = vmatprep.subr.mxu0 0.0
    %77 = vmatpush1.msra.mxu0 0.0
    %78 = vmatprep.subr.mxu0 0.0
    %79 = vmatpush1.msra.mxu0 0.0
    %80 = vmatprep.subr.mxu0 0.0
    %81 = vmatpush1.msra.mxu0 0.0
    %82 = vmatprep.subr.mxu0 0.0
    %83 = vmatpush1.msra.mxu0 0.0
    %84 = vmatprep.subr.mxu0 0.0
    %85 = vmatpush1.msra.mxu0 0.0
    %86 = vmatprep.subr.mxu0 0.0
    %87 = vmatpush1.msra.mxu0 0.0
    %88 = vmatprep.subr.mxu0 0.0
    %89 = vmatpush1.msra.mxu0 0.0
    %90 = vmatprep.subr.mxu0 0.0
    %91 = vmatpush1.msra.mxu0 0.0
    %92 = vmatprep.subr.mxu0 0.0
    %93 = vmatpush1.msra.mxu0 0.0
    %94 = vmatprep.subr.mxu0 0.0
    %95 = vmatpush1.msra.mxu0 0.0
    %96 = vmatprep.subr.mxu0 0.0
    %97 = vmatpush1.msra.mxu0 0.0
    %98 = vmatprep.subr.mxu0 0.0
    %99 = vmatpush1.msra.mxu0 0.0
    %100 = vmatprep.subr.mxu0 0.0
    %101 = vmatpush1.msra.mxu0 0.0
    %102 = vmatprep.subr.mxu0 0.0
    %103 = vmatpush1.msra.mxu0 0.0
    %104 = vmatprep.subr.mxu0 0.0
    %105 = vmatpush1.msra.mxu0 0.0
    %106 = vmatprep.subr.mxu0 0.0
    %107 = vmatpush1.msra.mxu0 0.0
    %108 = vmatprep.subr.mxu0 0.0
    %109 = vmatpush1.msra.mxu0 0.0
    %110 = vmatprep.subr.mxu0 0.0
    %111 = vmatpush1.msra.mxu0 0.0
    %112 = vmatprep.subr.mxu0 0.0
    %113 = vmatpush1.msra.mxu0 0.0
    %114 = vmatprep.subr.mxu0 0.0
    %115 = vmatpush1.msra.mxu0 0.0
    %116 = vmatprep.subr.mxu0 0.0
    %117 = vmatpush1.msra.mxu0 0.0
    %118 = vmatprep.subr.mxu0 0.0
    %119 = vmatpush1.msra.mxu0 0.0
    %120 = vmatprep.subr.mxu0 0.0
    %121 = vmatpush1.msra.mxu0 0.0
    %122 = vmatprep.subr.mxu0 0.0
    %123 = vmatpush1.msra.mxu0 0.0
    %124 = vmatprep.subr.mxu0 0.0
    %125 = vmatpush1.msra.mxu0 0.0
    %126 = vmatprep.subr.mxu0 0.0
    %127 = vmatpush1.msra.mxu0 0.0
    %128 = vmatprep.subr.mxu0 0.0
    %129 = vmatpush1.msra.mxu0 0.0
    %130 = vmatprep.subr.mxu0 0.0
    %131 = vmatpush1.msra.mxu0 0.0
    %132 = vmatprep.subr.mxu0 0.0
    %133 = vmatpush1.msra.mxu0 0.0
    %134 = vmatprep.mubr.f32.mxu0 0.0
    %135 = vmatmul.mubr.f32.gmra.mrb[0].mxu0 %v65
    %v136 = vpop.f32.mrb[0].mxu0
    %v137 = vadd.f32 0.0, %v136
    %v138 = vpop.f32.mrb[0].mxu0
    %139 = vmatprep.mubr.f32.mxu0 0.0
    %140 = vmatmul.mubr.f32.gmra.mrb[0].mxu0 %v68
    %v141 = vpop.f32.mrb[0].mxu0
    %v142 = vadd.f32 0.0, %v141
    %v143 = vpop.f32.mrb[0].mxu0
    %144 = vdwg.mxu0
    %146 = vset.pattern.permute.xlu0 0
    %147 = vperm.xlu0 %146, %v58
    %v148 = vpop.permute.xlu0 %147
    %151 = vset.pattern.permute.xlu0 0
    %152 = vperm.xlu0 %151, %v59
    %v153 = vpop.permute.xlu0 %152
    %v155 = vmul.f32 %v137, %v148
    %v156 = vmul.f32 %v142, %v153
    %vm157 = vcmask 64512
    %v159 = vsel %vm157, %v54, 0
    %v162 = vsel %vm157, %v55, 0
    %164 = vmatprep.subr.mxu0 0.0
    %165 = vmatpush1.msra.mxu0 %v47
    %166 = vmatprep.subr.mxu0 0.0
    %167 = vmatpush1.msra.mxu0 0.0
    %168 = vmatprep.subr.mxu0 0.0
    %169 = vmatpush1.msra.mxu0 0.0
    %170 = vmatprep.subr.mxu0 0.0
    %171 = vmatpush1.msra.mxu0 0.0
    %172 = vmatprep.subr.mxu0 0.0
    %173 = vmatpush1.msra.mxu0 0.0
    %174 = vmatprep.subr.mxu0 0.0
    %175 = vmatpush1.msra.mxu0 0.0
    %176 = vmatprep.subr.mxu0 0.0
    %177 = vmatpush1.msra.mxu0 0.0
    %178 = vmatprep.subr.mxu0 0.0
    %179 = vmatpush1.msra.mxu0 0.0
    %180 = vmatprep.subr.mxu0 0.0
    %181 = vmatpush1.msra.mxu0 0.0
    %182 = vmatprep.subr.mxu0 0.0
    %183 = vmatpush1.msra.mxu0 0.0
    %184 = vmatprep.subr.mxu0 0.0
    %185 = vmatpush1.msra.mxu0 0.0
    %186 = vmatprep.subr.mxu0 0.0
    %187 = vmatpush1.msra.mxu0 0.0
    %188 = vmatprep.subr.mxu0 0.0
    %189 = vmatpush1.msra.mxu0 0.0
    %190 = vmatprep.subr.mxu0 0.0
    %191 = vmatpush1.msra.mxu0 0.0
    %192 = vmatprep.subr.mxu0 0.0
    %193 = vmatpush1.msra.mxu0 0.0
    %194 = vmatprep.subr.mxu0 0.0
    %195 = vmatpush1.msra.mxu0 0.0
    %196 = vmatprep.subr.mxu0 0.0
    %197 = vmatpush1.msra.mxu0 0.0
    %198 = vmatprep.subr.mxu0 0.0
    %199 = vmatpush1.msra.mxu0 0.0
    %200 = vmatprep.subr.mxu0 0.0
    %201 = vmatpush1.msra.mxu0 0.0
    %202 = vmatprep.subr.mxu0 0.0
    %203 = vmatpush1.msra.mxu0 0.0
    %204 = vmatprep.subr.mxu0 0.0
    %205 = vmatpush1.msra.mxu0 0.0
    %206 = vmatprep.subr.mxu0 0.0
    %207 = vmatpush1.msra.mxu0 0.0
    %208 = vmatprep.subr.mxu0 0.0
    %209 = vmatpush1.msra.mxu0 0.0
    %210 = vmatprep.subr.mxu0 0.0
    %211 = vmatpush1.msra.mxu0 0.0
    %212 = vmatprep.subr.mxu0 0.0
    %213 = vmatpush1.msra.mxu0 0.0
    %214 = vmatprep.subr.mxu0 0.0
    %215 = vmatpush1.msra.mxu0 0.0
    %216 = vmatprep.subr.mxu0 0.0
    %217 = vmatpush1.msra.mxu0 0.0
    %218 = vmatprep.subr.mxu0 0.0
    %219 = vmatpush1.msra.mxu0 0.0
    %220 = vmatprep.subr.mxu0 0.0
    %221 = vmatpush1.msra.mxu0 0.0
    %222 = vmatprep.subr.mxu0 0.0
    %223 = vmatpush1.msra.mxu0 0.0
    %224 = vmatprep.subr.mxu0 0.0
    %225 = vmatpush1.msra.mxu0 0.0
    %226 = vmatprep.subr.mxu0 0.0
    %227 = vmatpush1.msra.mxu0 0.0
    %228 = vmatprep.mubr.f32.mxu0 0.0
    %229 = vmatmul.mubr.f32.gmra.mrb[0].mxu0 %v159
    %v230 = vpop.f32.mrb[0].mxu0
    %v231 = vadd.f32 0.0, %v230
    %v232 = vpop.f32.mrb[0].mxu0
    %233 = vmatprep.mubr.f32.mxu0 0.0
    %234 = vmatmul.mubr.f32.gmra.mrb[0].mxu0 %v162
    %v235 = vpop.f32.mrb[0].mxu0
    %v236 = vadd.f32 0.0, %v235
    %v237 = vpop.f32.mrb[0].mxu0
    %238 = vdwg.mxu0
    %240 = vset.pattern.permute.xlu0 0
    %241 = vperm.xlu0 %240, %v60
    %v242 = vpop.permute.xlu0 %241
    %245 = vset.pattern.permute.xlu0 0
    %246 = vperm.xlu0 %245, %v61
    %v247 = vpop.permute.xlu0 %246
    %v249 = vmul.f32 %v231, %v242
    %v250 = vmul.f32 %v236, %v247
    %v252 = vsel %vm63, %v57, 0
    %254 = vmatprep.subr.mxu0 0.0
    %255 = vmatpush1.msra.mxu0 %v45
    %256 = vmatprep.subr.mxu0 0.0
    %257 = vmatpush1.msra.mxu0 %v46
    %258 = vmatprep.subr.mxu0 0.0
    %259 = vmatpush1.msra.mxu0 0.0
    %260 = vmatprep.subr.mxu0 0.0
    %261 = vmatpush1.msra.mxu0 0.0
    %262 = vmatprep.subr.mxu0 0.0
    %263 = vmatpush1.msra.mxu0 0.0
    %264 = vmatprep.subr.mxu0 0.0
    %265 = vmatpush1.msra.mxu0 0.0
    %266 = vmatprep.subr.mxu0 0.0
    %267 = vmatpush1.msra.mxu0 0.0
    %268 = vmatprep.subr.mxu0 0.0
    %269 = vmatpush1.msra.mxu0 0.0
    %270 = vmatprep.subr.mxu0 0.0
    %271 = vmatpush1.msra.mxu0 0.0
    %272 = vmatprep.subr.mxu0 0.0
    %273 = vmatpush1.msra.mxu0 0.0
    %274 = vmatprep.subr.mxu0 0.0
    %275 = vmatpush1.msra.mxu0 0.0
    %276 = vmatprep.subr.mxu0 0.0
    %277 = vmatpush1.msra.mxu0 0.0
    %278 = vmatprep.subr.mxu0 0.0
    %279 = vmatpush1.msra.mxu0 0.0
    %280 = vmatprep.subr.mxu0 0.0
    %281 = vmatpush1.msra.mxu0 0.0
    %282 = vmatprep.subr.mxu0 0.0
    %283 = vmatpush1.msra.mxu0 0.0
    %284 = vmatprep.subr.mxu0 0.0
    %285 = vmatpush1.msra.mxu0 0.0
    %286 = vmatprep.subr.mxu0 0.0
    %287 = vmatpush1.msra.mxu0 0.0
    %288 = vmatprep.subr.mxu0 0.0
    %289 = vmatpush1.msra.mxu0 0.0
    %290 = vmatprep.subr.mxu0 0.0
    %291 = vmatpush1.msra.mxu0 0.0
    %292 = vmatprep.subr.mxu0 0.0
    %293 = vmatpush1.msra.mxu0 0.0
    %294 = vmatprep.subr.mxu0 0.0
    %295 = vmatpush1.msra.mxu0 0.0
    %296 = vmatprep.subr.mxu0 0.0
    %297 = vmatpush1.msra.mxu0 0.0
    %298 = vmatprep.subr.mxu0 0.0
    %299 = vmatpush1.msra.mxu0 0.0
    %300 = vmatprep.subr.mxu0 0.0
    %301 = vmatpush1.msra.mxu0 0.0
    %302 = vmatprep.subr.mxu0 0.0
    %303 = vmatpush1.msra.mxu0 0.0
    %304 = vmatprep.subr.mxu0 0.0
    %305 = vmatpush1.msra.mxu0 0.0
    %306 = vmatprep.subr.mxu0 0.0
    %307 = vmatpush1.msra.mxu0 0.0
    %308 = vmatprep.subr.mxu0 0.0
    %309 = vmatpush1.msra.mxu0 0.0
    %310 = vmatprep.subr.mxu0 0.0
    %311 = vmatpush1.msra.mxu0 0.0
    %312 = vmatprep.subr.mxu0 0.0
    %313 = vmatpush1.msra.mxu0 0.0
    %314 = vmatprep.subr.mxu0 0.0
    %315 = vmatpush1.msra.mxu0 0.0
    %316 = vmatprep.subr.mxu0 0.0
    %317 = vmatpush1.msra.mxu0 0.0
    %318 = vmatprep.mubr.f32.mxu0 0.0
    %319 = vmatmul.mubr.f32.gmra.mrb[0].mxu0 %v252
    %v320 = vpop.f32.mrb[0].mxu0
    %v321 = vadd.f32 0.0, %v320
    %v322 = vpop.f32.mrb[0].mxu0
    %323 = vdwg.mxu0
    %325 = vset.pattern.permute.xlu0 0
    %326 = vperm.xlu0 %325, %v62
    %v327 = vpop.permute.xlu0 %326
    %v329 = vmul.f32 %v321, %v327
    %v330 = vld [vmem:[%s8] sm:$0xff]
    %v331 = vld [vmem:[%s8 + $0x8] sm:$0xff]
    %v332 = vld [vmem:[%s8 + $0x10] sm:$0xff]
    %v333 = vld [vmem:[%s8 + $0x18] sm:$0xff]
    %v334 = vld [vmem:[%s8 + $0x20] sm:$0xff]
    %v335 = vld [vmem:[%s8 + $0x28] sm:$0xff]
    %v336 = vld [vmem:[%s8 + $0x30] sm:$0xff]
    %v337 = vld [vmem:[%s8 + $0x38] sm:$0xff]
    %v338 = vld [vmem:[%s8 + $0x40] sm:$0xff]
    %v339 = vld [vmem:[%s8 + $0x48] sm:$0xff]
    %v340 = vld [vmem:[%s8 + $0x50] sm:$0xff]
    %v341 = vld [vmem:[%s8 + $0x58] sm:$0xff]
    %v342 = vld [vmem:[%s10] sm:$0xff]
    %v343 = vld [vmem:[%s10 + $0x8] sm:$0xff]
    %v344 = vld [vmem:[%s10 + $0x10] sm:$0xff]
    %v345 = vld [vmem:[%s10 + $0x18] sm:$0xff]
    %v346 = vld [vmem:[%s10 + $0x20] sm:$0xff]
    %v347 = vld [vmem:[%s10 + $0x28] sm:$0xff]
    %v348 = vld [vmem:[%s10 + $0x30] sm:$0xff]
    %v349 = vld [vmem:[%s10 + $0x38] sm:$0xff]
    %v350 = vld [vmem:[%s9] sm:$0x1]
    %v351 = vld [vmem:[%s11] sm:$0x1]
    %vm352 = vcmask 261120
    %v354 = vsel %vm352, %v249, 0
    %v357 = vsel %vm352, %v250, 0
    %359 = vmatprep.subr.mxu0 0.0
    %360 = vmatpush1.msra.mxu0 %v334
    %361 = vmatprep.subr.mxu0 0.0
    %362 = vmatpush1.msra.mxu0 %v335
    %363 = vmatprep.subr.mxu0 0.0
    %364 = vmatpush1.msra.mxu0 %v336
    %365 = vmatprep.subr.mxu0 0.0
    %366 = vmatpush1.msra.mxu0 %v337
    %367 = vmatprep.subr.mxu0 0.0
    %368 = vmatpush1.msra.mxu0 0.0
    %369 = vmatprep.subr.mxu0 0.0
    %370 = vmatpush1.msra.mxu0 0.0
    %371 = vmatprep.subr.mxu0 0.0
    %372 = vmatpush1.msra.mxu0 0.0
    %373 = vmatprep.subr.mxu0 0.0
    %374 = vmatpush1.msra.mxu0 0.0
    %375 = vmatprep.subr.mxu0 0.0
    %376 = vmatpush1.msra.mxu0 0.0
    %377 = vmatprep.subr.mxu0 0.0
    %378 = vmatpush1.msra.mxu0 0.0
    %379 = vmatprep.subr.mxu0 0.0
    %380 = vmatpush1.msra.mxu0 0.0
    %381 = vmatprep.subr.mxu0 0.0
    %382 = vmatpush1.msra.mxu0 0.0
    %383 = vmatprep.subr.mxu0 0.0
    %384 = vmatpush1.msra.mxu0 0.0
    %385 = vmatprep.subr.mxu0 0.0
    %386 = vmatpush1.msra.mxu0 0.0
    %387 = vmatprep.subr.mxu0 0.0
    %388 = vmatpush1.msra.mxu0 0.0
    %389 = vmatprep.subr.mxu0 0.0
    %390 = vmatpush1.msra.mxu0 0.0
    %391 = vmatprep.subr.mxu0 0.0
    %392 = vmatpush1.msra.mxu0 0.0
    %393 = vmatprep.subr.mxu0 0.0
    %394 = vmatpush1.msra.mxu0 0.0
    %395 = vmatprep.subr.mxu0 0.0
    %396 = vmatpush1.msra.mxu0 0.0
    %397 = vmatprep.subr.mxu0 0.0
    %398 = vmatpush1.msra.mxu0 0.0
    %399 = vmatprep.subr.mxu0 0.0
    %400 = vmatpush1.msra.mxu0 0.0
    %401 = vmatprep.subr.mxu0 0.0
    %402 = vmatpush1.msra.mxu0 0.0
    %403 = vmatprep.subr.mxu0 0.0
    %404 = vmatpush1.msra.mxu0 0.0
    %405 = vmatprep.subr.mxu0 0.0
    %406 = vmatpush1.msra.mxu0 0.0
    %407 = vmatprep.subr.mxu0 0.0
    %408 = vmatpush1.msra.mxu0 0.0
    %409 = vmatprep.subr.mxu0 0.0
    %410 = vmatpush1.msra.mxu0 0.0
    %411 = vmatprep.subr.mxu0 0.0
    %412 = vmatpush1.msra.mxu0 0.0
    %413 = vmatprep.subr.mxu0 0.0
    %414 = vmatpush1.msra.mxu0 0.0
    %415 = vmatprep.subr.mxu0 0.0
    %416 = vmatpush1.msra.mxu0 0.0
    %417 = vmatprep.subr.mxu0 0.0
    %418 = vmatpush1.msra.mxu0 0.0
    %419 = vmatprep.subr.mxu0 0.0
    %420 = vmatpush1.msra.mxu0 0.0
    %421 = vmatprep.subr.mxu0 0.0
    %422 = vmatpush1.msra.mxu0 0.0
    %423 = vmatprep.mubr.f32.mxu0 0.0
    %424 = vmatmul.mubr.f32.gmra.mrb[0].mxu0 %v354
    %v425 = vpop.f32.mrb[0].mxu0
    %v426 = vadd.f32 0.0, %v425
    %v427 = vpop.f32.mrb[0].mxu0
    %428 = vmatprep.mubr.f32.mxu0 0.0
    %429 = vmatmul.mubr.f32.gmra.mrb[0].mxu0 %v357
    %v430 = vpop.f32.mrb[0].mxu0
    %v431 = vadd.f32 0.0, %v430
    %v432 = vpop.f32.mrb[0].mxu0
    %433 = vdwg.mxu0
    %v435 = vsel %vm352, %v155, 0
    %v438 = vsel %vm352, %v156, 0
    %440 = vmatprep.subr.mxu0 0.0
    %441 = vmatpush1.msra.mxu0 %v330
    %442 = vmatprep.subr.mxu0 0.0
    %443 = vmatpush1.msra.mxu0 %v331
    %444 = vmatprep.subr.mxu0 0.0
    %445 = vmatpush1.msra.mxu0 %v332
    %446 = vmatprep.subr.mxu0 0.0
    %447 = vmatpush1.msra.mxu0 %v333
    %448 = vmatprep.subr.mxu0 0.0
    %449 = vmatpush1.msra.mxu0 0.0
    %450 = vmatprep.subr.mxu0 0.0
    %451 = vmatpush1.msra.mxu0 0.0
    %452 = vmatprep.subr.mxu0 0.0
    %453 = vmatpush1.msra.mxu0 0.0
    %454 = vmatprep.subr.mxu0 0.0
    %455 = vmatpush1.msra.mxu0 0.0
    %456 = vmatprep.subr.mxu0 0.0
    %457 = vmatpush1.msra.mxu0 0.0
    %458 = vmatprep.subr.mxu0 0.0
    %459 = vmatpush1.msra.mxu0 0.0
    %460 = vmatprep.subr.mxu0 0.0
    %461 = vmatpush1.msra.mxu0 0.0
    %462 = vmatprep.subr.mxu0 0.0
    %463 = vmatpush1.msra.mxu0 0.0
    %464 = vmatprep.subr.mxu0 0.0
    %465 = vmatpush1.msra.mxu0 0.0
    %466 = vmatprep.subr.mxu0 0.0
    %467 = vmatpush1.msra.mxu0 0.0
    %468 = vmatprep.subr.mxu0 0.0
    %469 = vmatpush1.msra.mxu0 0.0
    %470 = vmatprep.subr.mxu0 0.0
    %471 = vmatpush1.msra.mxu0 0.0
    %472 = vmatprep.subr.mxu0 0.0
    %473 = vmatpush1.msra.mxu0 0.0
    %474 = vmatprep.subr.mxu0 0.0
    %475 = vmatpush1.msra.mxu0 0.0
    %476 = vmatprep.subr.mxu0 0.0
    %477 = vmatpush1.msra.mxu0 0.0
    %478 = vmatprep.subr.mxu0 0.0
    %479 = vmatpush1.msra.mxu0 0.0
    %480 = vmatprep.subr.mxu0 0.0
    %481 = vmatpush1.msra.mxu0 0.0
    %482 = vmatprep.subr.mxu0 0.0
    %483 = vmatpush1.msra.mxu0 0.0
    %484 = vmatprep.subr.mxu0 0.0
    %485 = vmatpush1.msra.mxu0 0.0
    %486 = vmatprep.subr.mxu0 0.0
    %487 = vmatpush1.msra.mxu0 0.0
    %488 = vmatprep.subr.mxu0 0.0
    %489 = vmatpush1.msra.mxu0 0.0
    %490 = vmatprep.subr.mxu0 0.0
    %491 = vmatpush1.msra.mxu0 0.0
    %492 = vmatprep.subr.mxu0 0.0
    %493 = vmatpush1.msra.mxu0 0.0
    %494 = vmatprep.subr.mxu0 0.0
    %495 = vmatpush1.msra.mxu0 0.0
    %496 = vmatprep.subr.mxu0 0.0
    %497 = vmatpush1.msra.mxu0 0.0
    %498 = vmatprep.subr.mxu0 0.0
    %499 = vmatpush1.msra.mxu0 0.0
    %500 = vmatprep.subr.mxu0 0.0
    %501 = vmatpush1.msra.mxu0 0.0
    %502 = vmatprep.subr.mxu0 0.0
    %503 = vmatpush1.msra.mxu0 0.0
    %504 = vmatprep.mubr.f32.mxu0 0.0
    %505 = vmatmul.mubr.f32.gmra.mrb[0].mxu0 %v435
    %v506 = vpop.f32.mrb[0].mxu0
    %v507 = vadd.f32 %v426, %v506
    %v508 = vpop.f32.mrb[0].mxu0
    %509 = vmatprep.mubr.f32.mxu0 0.0
    %510 = vmatmul.mubr.f32.gmra.mrb[0].mxu0 %v438
    %v511 = vpop.f32.mrb[0].mxu0
    %v512 = vadd.f32 %v431, %v511
    %v513 = vpop.f32.mrb[0].mxu0
    %514 = vdwg.mxu0
    %v516 = vsel %vm352, %v45, 0
    %v519 = vsel %vm352, %v46, 0
    %521 = vmatprep.subr.mxu0 0.0
    %522 = vmatpush1.msra.mxu0 %v338
    %523 = vmatprep.subr.mxu0 0.0
    %524 = vmatpush1.msra.mxu0 %v339
    %525 = vmatprep.subr.mxu0 0.0
    %526 = vmatpush1.msra.mxu0 %v340
    %527 = vmatprep.subr.mxu0 0.0
    %528 = vmatpush1.msra.mxu0 %v341
    %529 = vmatprep.subr.mxu0 0.0
    %530 = vmatpush1.msra.mxu0 0.0
    %531 = vmatprep.subr.mxu0 0.0
    %532 = vmatpush1.msra.mxu0 0.0
    %533 = vmatprep.subr.mxu0 0.0
    %534 = vmatpush1.msra.mxu0 0.0
    %535 = vmatprep.subr.mxu0 0.0
    %536 = vmatpush1.msra.mxu0 0.0
    %537 = vmatprep.subr.mxu0 0.0
    %538 = vmatpush1.msra.mxu0 0.0
    %539 = vmatprep.subr.mxu0 0.0
    %540 = vmatpush1.msra.mxu0 0.0
    %541 = vmatprep.subr.mxu0 0.0
    %542 = vmatpush1.msra.mxu0 0.0
    %543 = vmatprep.subr.mxu0 0.0
    %544 = vmatpush1.msra.mxu0 0.0
    %545 = vmatprep.subr.mxu0 0.0
    %546 = vmatpush1.msra.mxu0 0.0
    %547 = vmatprep.subr.mxu0 0.0
    %548 = vmatpush1.msra.mxu0 0.0
    %549 = vmatprep.subr.mxu0 0.0
    %550 = vmatpush1.msra.mxu0 0.0
    %551 = vmatprep.subr.mxu0 0.0
    %552 = vmatpush1.msra.mxu0 0.0
    %553 = vmatprep.subr.mxu0 0.0
    %554 = vmatpush1.msra.mxu0 0.0
    %555 = vmatprep.subr.mxu0 0.0
    %556 = vmatpush1.msra.mxu0 0.0
    %557 = vmatprep.subr.mxu0 0.0
    %558 = vmatpush1.msra.mxu0 0.0
    %559 = vmatprep.subr.mxu0 0.0
    %560 = vmatpush1.msra.mxu0 0.0
    %561 = vmatprep.subr.mxu0 0.0
    %562 = vmatpush1.msra.mxu0 0.0
    %563 = vmatprep.subr.mxu0 0.0
    %564 = vmatpush1.msra.mxu0 0.0
    %565 = vmatprep.subr.mxu0 0.0
    %566 = vmatpush1.msra.mxu0 0.0
    %567 = vmatprep.subr.mxu0 0.0
    %568 = vmatpush1.msra.mxu0 0.0
    %569 = vmatprep.subr.mxu0 0.0
    %570 = vmatpush1.msra.mxu0 0.0
    %571 = vmatprep.subr.mxu0 0.0
    %572 = vmatpush1.msra.mxu0 0.0
    %573 = vmatprep.subr.mxu0 0.0
    %574 = vmatpush1.msra.mxu0 0.0
    %575 = vmatprep.subr.mxu0 0.0
    %576 = vmatpush1.msra.mxu0 0.0
    %577 = vmatprep.subr.mxu0 0.0
    %578 = vmatpush1.msra.mxu0 0.0
    %579 = vmatprep.subr.mxu0 0.0
    %580 = vmatpush1.msra.mxu0 0.0
    %581 = vmatprep.subr.mxu0 0.0
    %582 = vmatpush1.msra.mxu0 0.0
    %583 = vmatprep.subr.mxu0 0.0
    %584 = vmatpush1.msra.mxu0 0.0
    %585 = vmatprep.mubr.f32.mxu0 0.0
    %586 = vmatmul.mubr.f32.gmra.mrb[0].mxu0 %v516
    %v587 = vpop.f32.mrb[0].mxu0
    %v588 = vadd.f32 0.0, %v587
    %v589 = vpop.f32.mrb[0].mxu0
    %590 = vmatprep.mubr.f32.mxu0 0.0
    %591 = vmatmul.mubr.f32.gmra.mrb[0].mxu0 %v519
    %v592 = vpop.f32.mrb[0].mxu0
    %v593 = vadd.f32 0.0, %v592
    %v594 = vpop.f32.mrb[0].mxu0
    %595 = vdwg.mxu0
    %v596 = vadd.f32 %v507, %v588
    %v597 = vadd.f32 %v512, %v593
    %v599 = vlaneseq
    %v600 = vshrl.u32 %v599, 7
    %v601 = vsub.s32 0, %v600
    %v602 = vrot.slane %v350, %v601
    %v604 = vadd.f32 %v596, %v602
    %v605 = vadd.f32 %v597, %v602
    %v607 = vsel %vm352, %v47, 0
    %609 = vmatprep.subr.mxu0 0.0
    %610 = vmatpush1.msra.mxu0 %v346
    %611 = vmatprep.subr.mxu0 0.0
    %612 = vmatpush1.msra.mxu0 %v347
    %613 = vmatprep.subr.mxu0 0.0
    %614 = vmatpush1.msra.mxu0 %v348
    %615 = vmatprep.subr.mxu0 0.0
    %616 = vmatpush1.msra.mxu0 %v349
    %617 = vmatprep.subr.mxu0 0.0
    %618 = vmatpush1.msra.mxu0 0.0
    %619 = vmatprep.subr.mxu0 0.0
    %620 = vmatpush1.msra.mxu0 0.0
    %621 = vmatprep.subr.mxu0 0.0
    %622 = vmatpush1.msra.mxu0 0.0
    %623 = vmatprep.subr.mxu0 0.0
    %624 = vmatpush1.msra.mxu0 0.0
    %625 = vmatprep.subr.mxu0 0.0
    %626 = vmatpush1.msra.mxu0 0.0
    %627 = vmatprep.subr.mxu0 0.0
    %628 = vmatpush1.msra.mxu0 0.0
    %629 = vmatprep.subr.mxu0 0.0
    %630 = vmatpush1.msra.mxu0 0.0
    %631 = vmatprep.subr.mxu0 0.0
    %632 = vmatpush1.msra.mxu0 0.0
    %633 = vmatprep.subr.mxu0 0.0
    %634 = vmatpush1.msra.mxu0 0.0
    %635 = vmatprep.subr.mxu0 0.0
    %636 = vmatpush1.msra.mxu0 0.0
    %637 = vmatprep.subr.mxu0 0.0
    %638 = vmatpush1.msra.mxu0 0.0
    %639 = vmatprep.subr.mxu0 0.0
    %640 = vmatpush1.msra.mxu0 0.0
    %641 = vmatprep.subr.mxu0 0.0
    %642 = vmatpush1.msra.mxu0 0.0
    %643 = vmatprep.subr.mxu0 0.0
    %644 = vmatpush1.msra.mxu0 0.0
    %645 = vmatprep.subr.mxu0 0.0
    %646 = vmatpush1.msra.mxu0 0.0
    %647 = vmatprep.subr.mxu0 0.0
    %648 = vmatpush1.msra.mxu0 0.0
    %649 = vmatprep.subr.mxu0 0.0
    %650 = vmatpush1.msra.mxu0 0.0
    %651 = vmatprep.subr.mxu0 0.0
    %652 = vmatpush1.msra.mxu0 0.0
    %653 = vmatprep.subr.mxu0 0.0
    %654 = vmatpush1.msra.mxu0 0.0
    %655 = vmatprep.subr.mxu0 0.0
    %656 = vmatpush1.msra.mxu0 0.0
    %657 = vmatprep.subr.mxu0 0.0
    %658 = vmatpush1.msra.mxu0 0.0
    %659 = vmatprep.subr.mxu0 0.0
    %660 = vmatpush1.msra.mxu0 0.0
    %661 = vmatprep.subr.mxu0 0.0
    %662 = vmatpush1.msra.mxu0 0.0
    %663 = vmatprep.subr.mxu0 0.0
    %664 = vmatpush1.msra.mxu0 0.0
    %665 = vmatprep.subr.mxu0 0.0
    %666 = vmatpush1.msra.mxu0 0.0
    %667 = vmatprep.subr.mxu0 0.0
    %668 = vmatpush1.msra.mxu0 0.0
    %669 = vmatprep.subr.mxu0 0.0
    %670 = vmatpush1.msra.mxu0 0.0
    %671 = vmatprep.subr.mxu0 0.0
    %672 = vmatpush1.msra.mxu0 0.0
    %673 = vmatprep.mubr.f32.mxu0 0.0
    %674 = vmatmul.mubr.f32.gmra.mrb[0].mxu0 %v607
    %v675 = vpop.f32.mrb[0].mxu0
    %v676 = vadd.f32 0.0, %v675
    %v677 = vpop.f32.mrb[0].mxu0
    %678 = vdwg.mxu0
    %v680 = vsel %vm352, %v329, 0
    %682 = vmatprep.subr.mxu0 0.0
    %683 = vmatpush1.msra.mxu0 %v342
    %684 = vmatprep.subr.mxu0 0.0
    %685 = vmatpush1.msra.mxu0 %v343
    %686 = vmatprep.subr.mxu0 0.0
    %687 = vmatpush1.msra.mxu0 %v344
    %688 = vmatprep.subr.mxu0 0.0
    %689 = vmatpush1.msra.mxu0 %v345
    %690 = vmatprep.subr.mxu0 0.0
    %691 = vmatpush1.msra.mxu0 0.0
    %692 = vmatprep.subr.mxu0 0.0
    %693 = vmatpush1.msra.mxu0 0.0
    %694 = vmatprep.subr.mxu0 0.0
    %695 = vmatpush1.msra.mxu0 0.0
    %696 = vmatprep.subr.mxu0 0.0
    %697 = vmatpush1.msra.mxu0 0.0
    %698 = vmatprep.subr.mxu0 0.0
    %699 = vmatpush1.msra.mxu0 0.0
    %700 = vmatprep.subr.mxu0 0.0
    %701 = vmatpush1.msra.mxu0 0.0
    %702 = vmatprep.subr.mxu0 0.0
    %703 = vmatpush1.msra.mxu0 0.0
    %704 = vmatprep.subr.mxu0 0.0
    %705 = vmatpush1.msra.mxu0 0.0
    %706 = vmatprep.subr.mxu0 0.0
    %707 = vmatpush1.msra.mxu0 0.0
    %708 = vmatprep.subr.mxu0 0.0
    %709 = vmatpush1.msra.mxu0 0.0
    %710 = vmatprep.subr.mxu0 0.0
    %711 = vmatpush1.msra.mxu0 0.0
    %712 = vmatprep.subr.mxu0 0.0
    %713 = vmatpush1.msra.mxu0 0.0
    %714 = vmatprep.subr.mxu0 0.0
    %715 = vmatpush1.msra.mxu0 0.0
    %716 = vmatprep.subr.mxu0 0.0
    %717 = vmatpush1.msra.mxu0 0.0
    %718 = vmatprep.subr.mxu0 0.0
    %719 = vmatpush1.msra.mxu0 0.0
    %720 = vmatprep.subr.mxu0 0.0
    %721 = vmatpush1.msra.mxu0 0.0
    %722 = vmatprep.subr.mxu0 0.0
    %723 = vmatpush1.msra.mxu0 0.0
    %724 = vmatprep.subr.mxu0 0.0
    %725 = vmatpush1.msra.mxu0 0.0
    %726 = vmatprep.subr.mxu0 0.0
    %727 = vmatpush1.msra.mxu0 0.0
    %728 = vmatprep.subr.mxu0 0.0
    %729 = vmatpush1.msra.mxu0 0.0
    %730 = vmatprep.subr.mxu0 0.0
    %731 = vmatpush1.msra.mxu0 0.0
    %732 = vmatprep.subr.mxu0 0.0
    %733 = vmatpush1.msra.mxu0 0.0
    %734 = vmatprep.subr.mxu0 0.0
    %735 = vmatpush1.msra.mxu0 0.0
    %736 = vmatprep.subr.mxu0 0.0
    %737 = vmatpush1.msra.mxu0 0.0
    %738 = vmatprep.subr.mxu0 0.0
    %739 = vmatpush1.msra.mxu0 0.0
    %740 = vmatprep.subr.mxu0 0.0
    %741 = vmatpush1.msra.mxu0 0.0
    %742 = vmatprep.subr.mxu0 0.0
    %743 = vmatpush1.msra.mxu0 0.0
    %744 = vmatprep.subr.mxu0 0.0
    %745 = vmatpush1.msra.mxu0 0.0
    %746 = vmatprep.mubr.f32.mxu0 0.0
    %747 = vmatmul.mubr.f32.gmra.mrb[0].mxu0 %v680
    %v748 = vpop.f32.mrb[0].mxu0
    %v749 = vadd.f32 %v676, %v748
    %v750 = vpop.f32.mrb[0].mxu0
    %751 = vdwg.mxu0
    %v753 = vlaneseq
    %v754 = vshrl.u32 %v753, 7
    %v755 = vsub.s32 0, %v754
    %v756 = vrot.slane %v351, %v755
    %v758 = vadd.f32 %v749, %v756
    %v759 = vmax.f32 %v604, 0.0
    %v760 = vmax.f32 %v605, 0.0
    %v761 = vmax.f32 %v758, 0.0
    %762 = vmatprep.subr.mxu0 0.0
    %763 = vmatpush1.msra.mxu0 %v759
    %764 = vmatprep.subr.mxu0 0.0
    %765 = vmatpush1.msra.mxu0 %v760
    %766 = vmatprep.subr.mxu0 0.0
    %767 = vmatpush1.msra.mxu0 0.0
    %768 = vmatprep.subr.mxu0 0.0
    %769 = vmatpush1.msra.mxu0 0.0
    %770 = vmatprep.subr.mxu0 0.0
    %771 = vmatpush1.msra.mxu0 0.0
    %772 = vmatprep.subr.mxu0 0.0
    %773 = vmatpush1.msra.mxu0 0.0
    %774 = vmatprep.subr.mxu0 0.0
    %775 = vmatpush1.msra.mxu0 0.0
    %776 = vmatprep.subr.mxu0 0.0
    %777 = vmatpush1.msra.mxu0 0.0
    %778 = vmatprep.subr.mxu0 0.0
    %779 = vmatpush1.msra.mxu0 0.0
    %780 = vmatprep.subr.mxu0 0.0
    %781 = vmatpush1.msra.mxu0 0.0
    %782 = vmatprep.subr.mxu0 0.0
    %783 = vmatpush1.msra.mxu0 0.0
    %784 = vmatprep.subr.mxu0 0.0
    %785 = vmatpush1.msra.mxu0 0.0
    %786 = vmatprep.subr.mxu0 0.0
    %787 = vmatpush1.msra.mxu0 0.0
    %788 = vmatprep.subr.mxu0 0.0
    %789 = vmatpush1.msra.mxu0 0.0
    %790 = vmatprep.subr.mxu0 0.0
    %791 = vmatpush1.msra.mxu0 0.0
    %792 = vmatprep.subr.mxu0 0.0
    %793 = vmatpush1.msra.mxu0 0.0
    %794 = vmatprep.subr.mxu0 0.0
    %795 = vmatpush1.msra.mxu0 0.0
    %796 = vmatprep.subr.mxu0 0.0
    %797 = vmatpush1.msra.mxu0 0.0
    %798 = vmatprep.subr.mxu0 0.0
    %799 = vmatpush1.msra.mxu0 0.0
    %800 = vmatprep.subr.mxu0 0.0
    %801 = vmatpush1.msra.mxu0 0.0
    %802 = vmatprep.subr.mxu0 0.0
    %803 = vmatpush1.msra.mxu0 0.0
    %804 = vmatprep.subr.mxu0 0.0
    %805 = vmatpush1.msra.mxu0 0.0
    %806 = vmatprep.subr.mxu0 0.0
    %807 = vmatpush1.msra.mxu0 0.0
    %808 = vmatprep.subr.mxu0 0.0
    %809 = vmatpush1.msra.mxu0 0.0
    %810 = vmatprep.subr.mxu0 0.0
    %811 = vmatpush1.msra.mxu0 0.0
    %812 = vmatprep.subr.mxu0 0.0
    %813 = vmatpush1.msra.mxu0 0.0
    %814 = vmatprep.subr.mxu0 0.0
    %815 = vmatpush1.msra.mxu0 0.0
    %816 = vmatprep.subr.mxu0 0.0
    %817 = vmatpush1.msra.mxu0 0.0
    %818 = vmatprep.subr.mxu0 0.0
    %819 = vmatpush1.msra.mxu0 0.0
    %820 = vmatprep.subr.mxu0 0.0
    %821 = vmatpush1.msra.mxu0 0.0
    %822 = vmatprep.subr.mxu0 0.0
    %823 = vmatpush1.msra.mxu0 0.0
    %824 = vmatprep.subr.mxu0 0.0
    %825 = vmatpush1.msra.mxu0 0.0
    %826 = vmatprep.mubr.f32.mxu0 0.0
    %827 = vmatmul.mubr.f32.gmra.mrb[0].mxu0 %v65
    %v828 = vpop.f32.mrb[0].mxu0
    %v829 = vadd.f32 0.0, %v828
    %v830 = vpop.f32.mrb[0].mxu0
    %831 = vmatprep.mubr.f32.mxu0 0.0
    %832 = vmatmul.mubr.f32.gmra.mrb[0].mxu0 %v68
    %v833 = vpop.f32.mrb[0].mxu0
    %v834 = vadd.f32 0.0, %v833
    %v835 = vpop.f32.mrb[0].mxu0
    %836 = vdwg.mxu0
    %v837 = vmul.f32 %v829, %v148
    %v838 = vmul.f32 %v834, %v153
    %839 = vmatprep.subr.mxu0 0.0
    %840 = vmatpush1.msra.mxu0 %v761
    %841 = vmatprep.subr.mxu0 0.0
    %842 = vmatpush1.msra.mxu0 0.0
    %843 = vmatprep.subr.mxu0 0.0
    %844 = vmatpush1.msra.mxu0 0.0
    %845 = vmatprep.subr.mxu0 0.0
    %846 = vmatpush1.msra.mxu0 0.0
    %847 = vmatprep.subr.mxu0 0.0
    %848 = vmatpush1.msra.mxu0 0.0
    %849 = vmatprep.subr.mxu0 0.0
    %850 = vmatpush1.msra.mxu0 0.0
    %851 = vmatprep.subr.mxu0 0.0
    %852 = vmatpush1.msra.mxu0 0.0
    %853 = vmatprep.subr.mxu0 0.0
    %854 = vmatpush1.msra.mxu0 0.0
    %855 = vmatprep.subr.mxu0 0.0
    %856 = vmatpush1.msra.mxu0 0.0
    %857 = vmatprep.subr.mxu0 0.0
    %858 = vmatpush1.msra.mxu0 0.0
    %859 = vmatprep.subr.mxu0 0.0
    %860 = vmatpush1.msra.mxu0 0.0
    %861 = vmatprep.subr.mxu0 0.0
    %862 = vmatpush1.msra.mxu0 0.0
    %863 = vmatprep.subr.mxu0 0.0
    %864 = vmatpush1.msra.mxu0 0.0
    %865 = vmatprep.subr.mxu0 0.0
    %866 = vmatpush1.msra.mxu0 0.0
    %867 = vmatprep.subr.mxu0 0.0
    %868 = vmatpush1.msra.mxu0 0.0
    %869 = vmatprep.subr.mxu0 0.0
    %870 = vmatpush1.msra.mxu0 0.0
    %871 = vmatprep.subr.mxu0 0.0
    %872 = vmatpush1.msra.mxu0 0.0
    %873 = vmatprep.subr.mxu0 0.0
    %874 = vmatpush1.msra.mxu0 0.0
    %875 = vmatprep.subr.mxu0 0.0
    %876 = vmatpush1.msra.mxu0 0.0
    %877 = vmatprep.subr.mxu0 0.0
    %878 = vmatpush1.msra.mxu0 0.0
    %879 = vmatprep.subr.mxu0 0.0
    %880 = vmatpush1.msra.mxu0 0.0
    %881 = vmatprep.subr.mxu0 0.0
    %882 = vmatpush1.msra.mxu0 0.0
    %883 = vmatprep.subr.mxu0 0.0
    %884 = vmatpush1.msra.mxu0 0.0
    %885 = vmatprep.subr.mxu0 0.0
    %886 = vmatpush1.msra.mxu0 0.0
    %887 = vmatprep.subr.mxu0 0.0
    %888 = vmatpush1.msra.mxu0 0.0
    %889 = vmatprep.subr.mxu0 0.0
    %890 = vmatpush1.msra.mxu0 0.0
    %891 = vmatprep.subr.mxu0 0.0
    %892 = vmatpush1.msra.mxu0 0.0
    %893 = vmatprep.subr.mxu0 0.0
    %894 = vmatpush1.msra.mxu0 0.0
    %895 = vmatprep.subr.mxu0 0.0
    %896 = vmatpush1.msra.mxu0 0.0
    %897 = vmatprep.subr.mxu0 0.0
    %898 = vmatpush1.msra.mxu0 0.0
    %899 = vmatprep.subr.mxu0 0.0
    %900 = vmatpush1.msra.mxu0 0.0
    %901 = vmatprep.subr.mxu0 0.0
    %902 = vmatpush1.msra.mxu0 0.0
    %903 = vmatprep.mubr.f32.mxu0 0.0
    %904 = vmatmul.mubr.f32.gmra.mrb[0].mxu0 %v159
    %v905 = vpop.f32.mrb[0].mxu0
    %v906 = vadd.f32 0.0, %v905
    %v907 = vpop.f32.mrb[0].mxu0
    %908 = vmatprep.mubr.f32.mxu0 0.0
    %909 = vmatmul.mubr.f32.gmra.mrb[0].mxu0 %v162
    %v910 = vpop.f32.mrb[0].mxu0
    %v911 = vadd.f32 0.0, %v910
    %v912 = vpop.f32.mrb[0].mxu0
    %913 = vdwg.mxu0
    %v914 = vmul.f32 %v906, %v242
    %v915 = vmul.f32 %v911, %v247
    %916 = vmatprep.subr.mxu0 0.0
    %917 = vmatpush1.msra.mxu0 %v759
    %918 = vmatprep.subr.mxu0 0.0
    %919 = vmatpush1.msra.mxu0 %v760
    %920 = vmatprep.subr.mxu0 0.0
    %921 = vmatpush1.msra.mxu0 0.0
    %922 = vmatprep.subr.mxu0 0.0
    %923 = vmatpush1.msra.mxu0 0.0
    %924 = vmatprep.subr.mxu0 0.0
    %925 = vmatpush1.msra.mxu0 0.0
    %926 = vmatprep.subr.mxu0 0.0
    %927 = vmatpush1.msra.mxu0 0.0
    %928 = vmatprep.subr.mxu0 0.0
    %929 = vmatpush1.msra.mxu0 0.0
    %930 = vmatprep.subr.mxu0 0.0
    %931 = vmatpush1.msra.mxu0 0.0
    %932 = vmatprep.subr.mxu0 0.0
    %933 = vmatpush1.msra.mxu0 0.0
    %934 = vmatprep.subr.mxu0 0.0
    %935 = vmatpush1.msra.mxu0 0.0
    %936 = vmatprep.subr.mxu0 0.0
    %937 = vmatpush1.msra.mxu0 0.0
    %938 = vmatprep.subr.mxu0 0.0
    %939 = vmatpush1.msra.mxu0 0.0
    %940 = vmatprep.subr.mxu0 0.0
    %941 = vmatpush1.msra.mxu0 0.0
    %942 = vmatprep.subr.mxu0 0.0
    %943 = vmatpush1.msra.mxu0 0.0
    %944 = vmatprep.subr.mxu0 0.0
    %945 = vmatpush1.msra.mxu0 0.0
    %946 = vmatprep.subr.mxu0 0.0
    %947 = vmatpush1.msra.mxu0 0.0
    %948 = vmatprep.subr.mxu0 0.0
    %949 = vmatpush1.msra.mxu0 0.0
    %950 = vmatprep.subr.mxu0 0.0
    %951 = vmatpush1.msra.mxu0 0.0
    %952 = vmatprep.subr.mxu0 0.0
    %953 = vmatpush1.msra.mxu0 0.0
    %954 = vmatprep.subr.mxu0 0.0
    %955 = vmatpush1.msra.mxu0 0.0
    %956 = vmatprep.subr.mxu0 0.0
    %957 = vmatpush1.msra.mxu0 0.0
    %958 = vmatprep.subr.mxu0 0.0
    %959 = vmatpush1.msra.mxu0 0.0
    %960 = vmatprep.subr.mxu0 0.0
    %961 = vmatpush1.msra.mxu0 0.0
    %962 = vmatprep.subr.mxu0 0.0
    %963 = vmatpush1.msra.mxu0 0.0
    %964 = vmatprep.subr.mxu0 0.0
    %965 = vmatpush1.msra.mxu0 0.0
    %966 = vmatprep.subr.mxu0 0.0
    %967 = vmatpush1.msra.mxu0 0.0
    %968 = vmatprep.subr.mxu0 0.0
    %969 = vmatpush1.msra.mxu0 0.0
    %970 = vmatprep.subr.mxu0 0.0
    %971 = vmatpush1.msra.mxu0 0.0
    %972 = vmatprep.subr.mxu0 0.0
    %973 = vmatpush1.msra.mxu0 0.0
    %974 = vmatprep.subr.mxu0 0.0
    %975 = vmatpush1.msra.mxu0 0.0
    %976 = vmatprep.subr.mxu0 0.0
    %977 = vmatpush1.msra.mxu0 0.0
    %978 = vmatprep.subr.mxu0 0.0
    %979 = vmatpush1.msra.mxu0 0.0
    %980 = vmatprep.mubr.f32.mxu0 0.0
    %981 = vmatmul.mubr.f32.gmra.mrb[0].mxu0 %v252
    %v982 = vpop.f32.mrb[0].mxu0
    %v983 = vadd.f32 0.0, %v982
    %v984 = vpop.f32.mrb[0].mxu0
    %985 = vdwg.mxu0
    %v986 = vmul.f32 %v983, %v327
    %s987 = scalar_lea.vmem %s8, 96
    %v988 = vld [vmem:[%s987] sm:$0xff]
    %v989 = vld [vmem:[%s987 + $0x8] sm:$0xff]
    %v990 = vld [vmem:[%s987 + $0x10] sm:$0xff]
    %v991 = vld [vmem:[%s987 + $0x18] sm:$0xff]
    %v992 = vld [vmem:[%s987 + $0x20] sm:$0xff]
    %v993 = vld [vmem:[%s987 + $0x28] sm:$0xff]
    %v994 = vld [vmem:[%s987 + $0x30] sm:$0xff]
    %v995 = vld [vmem:[%s987 + $0x38] sm:$0xff]
    %v996 = vld [vmem:[%s987 + $0x40] sm:$0xff]
    %v997 = vld [vmem:[%s987 + $0x48] sm:$0xff]
    %v998 = vld [vmem:[%s987 + $0x50] sm:$0xff]
    %v999 = vld [vmem:[%s987 + $0x58] sm:$0xff]
    %s1000 = scalar_lea.vmem %s10, 64
    %v1001 = vld [vmem:[%s1000] sm:$0xff]
    %v1002 = vld [vmem:[%s1000 + $0x8] sm:$0xff]
    %v1003 = vld [vmem:[%s1000 + $0x10] sm:$0xff]
    %v1004 = vld [vmem:[%s1000 + $0x18] sm:$0xff]
    %v1005 = vld [vmem:[%s1000 + $0x20] sm:$0xff]
    %v1006 = vld [vmem:[%s1000 + $0x28] sm:$0xff]
    %v1007 = vld [vmem:[%s1000 + $0x30] sm:$0xff]
    %v1008 = vld [vmem:[%s1000 + $0x38] sm:$0xff]
    %s1009 = scalar_lea.vmem %s9, 1
    %v1010 = vld [vmem:[%s1009] sm:$0x1]
    %s1011 = scalar_lea.vmem %s11, 1
    %v1012 = vld [vmem:[%s1011] sm:$0x1]
    %v1014 = vsel %vm352, %v914, 0
    %v1017 = vsel %vm352, %v915, 0
    %1019 = vmatprep.subr.mxu0 0.0
    %1020 = vmatpush1.msra.mxu0 %v992
    %1021 = vmatprep.subr.mxu0 0.0
    %1022 = vmatpush1.msra.mxu0 %v993
    %1023 = vmatprep.subr.mxu0 0.0
    %1024 = vmatpush1.msra.mxu0 %v994
    %1025 = vmatprep.subr.mxu0 0.0
    %1026 = vmatpush1.msra.mxu0 %v995
    %1027 = vmatprep.subr.mxu0 0.0
    %1028 = vmatpush1.msra.mxu0 0.0
    %1029 = vmatprep.subr.mxu0 0.0
    %1030 = vmatpush1.msra.mxu0 0.0
    %1031 = vmatprep.subr.mxu0 0.0
    %1032 = vmatpush1.msra.mxu0 0.0
    %1033 = vmatprep.subr.mxu0 0.0
    %1034 = vmatpush1.msra.mxu0 0.0
    %1035 = vmatprep.subr.mxu0 0.0
    %1036 = vmatpush1.msra.mxu0 0.0
    %1037 = vmatprep.subr.mxu0 0.0
    %1038 = vmatpush1.msra.mxu0 0.0
    %1039 = vmatprep.subr.mxu0 0.0
    %1040 = vmatpush1.msra.mxu0 0.0
    %1041 = vmatprep.subr.mxu0 0.0
    %1042 = vmatpush1.msra.mxu0 0.0
    %1043 = vmatprep.subr.mxu0 0.0
    %1044 = vmatpush1.msra.mxu0 0.0
    %1045 = vmatprep.subr.mxu0 0.0
    %1046 = vmatpush1.msra.mxu0 0.0
    %1047 = vmatprep.subr.mxu0 0.0
    %1048 = vmatpush1.msra.mxu0 0.0
    %1049 = vmatprep.subr.mxu0 0.0
    %1050 = vmatpush1.msra.mxu0 0.0
    %1051 = vmatprep.subr.mxu0 0.0
    %1052 = vmatpush1.msra.mxu0 0.0
    %1053 = vmatprep.subr.mxu0 0.0
    %1054 = vmatpush1.msra.mxu0 0.0
    %1055 = vmatprep.subr.mxu0 0.0
    %1056 = vmatpush1.msra.mxu0 0.0
    %1057 = vmatprep.subr.mxu0 0.0
    %1058 = vmatpush1.msra.mxu0 0.0
    %1059 = vmatprep.subr.mxu0 0.0
    %1060 = vmatpush1.msra.mxu0 0.0
    %1061 = vmatprep.subr.mxu0 0.0
    %1062 = vmatpush1.msra.mxu0 0.0
    %1063 = vmatprep.subr.mxu0 0.0
    %1064 = vmatpush1.msra.mxu0 0.0
    %1065 = vmatprep.subr.mxu0 0.0
    %1066 = vmatpush1.msra.mxu0 0.0
    %1067 = vmatprep.subr.mxu0 0.0
    %1068 = vmatpush1.msra.mxu0 0.0
    %1069 = vmatprep.subr.mxu0 0.0
    %1070 = vmatpush1.msra.mxu0 0.0
    %1071 = vmatprep.subr.mxu0 0.0
    %1072 = vmatpush1.msra.mxu0 0.0
    %1073 = vmatprep.subr.mxu0 0.0
    %1074 = vmatpush1.msra.mxu0 0.0
    %1075 = vmatprep.subr.mxu0 0.0
    %1076 = vmatpush1.msra.mxu0 0.0
    %1077 = vmatprep.subr.mxu0 0.0
    %1078 = vmatpush1.msra.mxu0 0.0
    %1079 = vmatprep.subr.mxu0 0.0
    %1080 = vmatpush1.msra.mxu0 0.0
    %1081 = vmatprep.subr.mxu0 0.0
    %1082 = vmatpush1.msra.mxu0 0.0
    %1083 = vmatprep.mubr.f32.mxu0 0.0
    %1084 = vmatmul.mubr.f32.gmra.mrb[0].mxu0 %v1014
    %v1085 = vpop.f32.mrb[0].mxu0
    %v1086 = vadd.f32 0.0, %v1085
    %v1087 = vpop.f32.mrb[0].mxu0
    %1088 = vmatprep.mubr.f32.mxu0 0.0
    %1089 = vmatmul.mubr.f32.gmra.mrb[0].mxu0 %v1017
    %v1090 = vpop.f32.mrb[0].mxu0
    %v1091 = vadd.f32 0.0, %v1090
    %v1092 = vpop.f32.mrb[0].mxu0
    %1093 = vdwg.mxu0
    %v1095 = vsel %vm352, %v837, 0
    %v1098 = vsel %vm352, %v838, 0
    %1100 = vmatprep.subr.mxu0 0.0
    %1101 = vmatpush1.msra.mxu0 %v988
    %1102 = vmatprep.subr.mxu0 0.0
    %1103 = vmatpush1.msra.mxu0 %v989
    %1104 = vmatprep.subr.mxu0 0.0
    %1105 = vmatpush1.msra.mxu0 %v990
    %1106 = vmatprep.subr.mxu0 0.0
    %1107 = vmatpush1.msra.mxu0 %v991
    %1108 = vmatprep.subr.mxu0 0.0
    %1109 = vmatpush1.msra.mxu0 0.0
    %1110 = vmatprep.subr.mxu0 0.0
    %1111 = vmatpush1.msra.mxu0 0.0
    %1112 = vmatprep.subr.mxu0 0.0
    %1113 = vmatpush1.msra.mxu0 0.0
    %1114 = vmatprep.subr.mxu0 0.0
    %1115 = vmatpush1.msra.mxu0 0.0
    %1116 = vmatprep.subr.mxu0 0.0
    %1117 = vmatpush1.msra.mxu0 0.0
    %1118 = vmatprep.subr.mxu0 0.0
    %1119 = vmatpush1.msra.mxu0 0.0
    %1120 = vmatprep.subr.mxu0 0.0
    %1121 = vmatpush1.msra.mxu0 0.0
    %1122 = vmatprep.subr.mxu0 0.0
    %1123 = vmatpush1.msra.mxu0 0.0
    %1124 = vmatprep.subr.mxu0 0.0
    %1125 = vmatpush1.msra.mxu0 0.0
    %1126 = vmatprep.subr.mxu0 0.0
    %1127 = vmatpush1.msra.mxu0 0.0
    %1128 = vmatprep.subr.mxu0 0.0
    %1129 = vmatpush1.msra.mxu0 0.0
    %1130 = vmatprep.subr.mxu0 0.0
    %1131 = vmatpush1.msra.mxu0 0.0
    %1132 = vmatprep.subr.mxu0 0.0
    %1133 = vmatpush1.msra.mxu0 0.0
    %1134 = vmatprep.subr.mxu0 0.0
    %1135 = vmatpush1.msra.mxu0 0.0
    %1136 = vmatprep.subr.mxu0 0.0
    %1137 = vmatpush1.msra.mxu0 0.0
    %1138 = vmatprep.subr.mxu0 0.0
    %1139 = vmatpush1.msra.mxu0 0.0
    %1140 = vmatprep.subr.mxu0 0.0
    %1141 = vmatpush1.msra.mxu0 0.0
    %1142 = vmatprep.subr.mxu0 0.0
    %1143 = vmatpush1.msra.mxu0 0.0
    %1144 = vmatprep.subr.mxu0 0.0
    %1145 = vmatpush1.msra.mxu0 0.0
    %1146 = vmatprep.subr.mxu0 0.0
    %1147 = vmatpush1.msra.mxu0 0.0
    %1148 = vmatprep.subr.mxu0 0.0
    %1149 = vmatpush1.msra.mxu0 0.0
    %1150 = vmatprep.subr.mxu0 0.0
    %1151 = vmatpush1.msra.mxu0 0.0
    %1152 = vmatprep.subr.mxu0 0.0
    %1153 = vmatpush1.msra.mxu0 0.0
    %1154 = vmatprep.subr.mxu0 0.0
    %1155 = vmatpush1.msra.mxu0 0.0
    %1156 = vmatprep.subr.mxu0 0.0
    %1157 = vmatpush1.msra.mxu0 0.0
    %1158 = vmatprep.subr.mxu0 0.0
    %1159 = vmatpush1.msra.mxu0 0.0
    %1160 = vmatprep.subr.mxu0 0.0
    %1161 = vmatpush1.msra.mxu0 0.0
    %1162 = vmatprep.subr.mxu0 0.0
    %1163 = vmatpush1.msra.mxu0 0.0
    %1164 = vmatprep.mubr.f32.mxu0 0.0
    %1165 = vmatmul.mubr.f32.gmra.mrb[0].mxu0 %v1095
    %v1166 = vpop.f32.mrb[0].mxu0
    %v1167 = vadd.f32 %v1086, %v1166
    %v1168 = vpop.f32.mrb[0].mxu0
    %1169 = vmatprep.mubr.f32.mxu0 0.0
    %1170 = vmatmul.mubr.f32.gmra.mrb[0].mxu0 %v1098
    %v1171 = vpop.f32.mrb[0].mxu0
    %v1172 = vadd.f32 %v1091, %v1171
    %v1173 = vpop.f32.mrb[0].mxu0
    %1174 = vdwg.mxu0
    %v1176 = vsel %vm352, %v759, 0
    %v1179 = vsel %vm352, %v760, 0
    %1181 = vmatprep.subr.mxu0 0.0
    %1182 = vmatpush1.msra.mxu0 %v996
    %1183 = vmatprep.subr.mxu0 0.0
    %1184 = vmatpush1.msra.mxu0 %v997
    %1185 = vmatprep.subr.mxu0 0.0
    %1186 = vmatpush1.msra.mxu0 %v998
    %1187 = vmatprep.subr.mxu0 0.0
    %1188 = vmatpush1.msra.mxu0 %v999
    %1189 = vmatprep.subr.mxu0 0.0
    %1190 = vmatpush1.msra.mxu0 0.0
    %1191 = vmatprep.subr.mxu0 0.0
    %1192 = vmatpush1.msra.mxu0 0.0
    %1193 = vmatprep.subr.mxu0 0.0
    %1194 = vmatpush1.msra.mxu0 0.0
    %1195 = vmatprep.subr.mxu0 0.0
    %1196 = vmatpush1.msra.mxu0 0.0
    %1197 = vmatprep.subr.mxu0 0.0
    %1198 = vmatpush1.msra.mxu0 0.0
    %1199 = vmatprep.subr.mxu0 0.0
    %1200 = vmatpush1.msra.mxu0 0.0
    %1201 = vmatprep.subr.mxu0 0.0
    %1202 = vmatpush1.msra.mxu0 0.0
    %1203 = vmatprep.subr.mxu0 0.0
    %1204 = vmatpush1.msra.mxu0 0.0
    %1205 = vmatprep.subr.mxu0 0.0
    %1206 = vmatpush1.msra.mxu0 0.0
    %1207 = vmatprep.subr.mxu0 0.0
    %1208 = vmatpush1.msra.mxu0 0.0
    %1209 = vmatprep.subr.mxu0 0.0
    %1210 = vmatpush1.msra.mxu0 0.0
    %1211 = vmatprep.subr.mxu0 0.0
    %1212 = vmatpush1.msra.mxu0 0.0
    %1213 = vmatprep.subr.mxu0 0.0
    %1214 = vmatpush1.msra.mxu0 0.0
    %1215 = vmatprep.subr.mxu0 0.0
    %1216 = vmatpush1.msra.mxu0 0.0
    %1217 = vmatprep.subr.mxu0 0.0
    %1218 = vmatpush1.msra.mxu0 0.0
    %1219 = vmatprep.subr.mxu0 0.0
    %1220 = vmatpush1.msra.mxu0 0.0
    %1221 = vmatprep.subr.mxu0 0.0
    %1222 = vmatpush1.msra.mxu0 0.0
    %1223 = vmatprep.subr.mxu0 0.0
    %1224 = vmatpush1.msra.mxu0 0.0
    %1225 = vmatprep.subr.mxu0 0.0
    %1226 = vmatpush1.msra.mxu0 0.0
    %1227 = vmatprep.subr.mxu0 0.0
    %1228 = vmatpush1.msra.mxu0 0.0
    %1229 = vmatprep.subr.mxu0 0.0
    %1230 = vmatpush1.msra.mxu0 0.0
    %1231 = vmatprep.subr.mxu0 0.0
    %1232 = vmatpush1.msra.mxu0 0.0
    %1233 = vmatprep.subr.mxu0 0.0
    %1234 = vmatpush1.msra.mxu0 0.0
    %1235 = vmatprep.subr.mxu0 0.0
    %1236 = vmatpush1.msra.mxu0 0.0
    %1237 = vmatprep.subr.mxu0 0.0
    %1238 = vmatpush1.msra.mxu0 0.0
    %1239 = vmatprep.subr.mxu0 0.0
    %1240 = vmatpush1.msra.mxu0 0.0
    %1241 = vmatprep.subr.mxu0 0.0
    %1242 = vmatpush1.msra.mxu0 0.0
    %1243 = vmatprep.subr.mxu0 0.0
    %1244 = vmatpush1.msra.mxu0 0.0
    %1245 = vmatprep.mubr.f32.mxu0 0.0
    %1246 = vmatmul.mubr.f32.gmra.mrb[0].mxu0 %v1176
    %v1247 = vpop.f32.mrb[0].mxu0
    %v1248 = vadd.f32 0.0, %v1247
    %v1249 = vpop.f32.mrb[0].mxu0
    %1250 = vmatprep.mubr.f32.mxu0 0.0
    %1251 = vmatmul.mubr.f32.gmra.mrb[0].mxu0 %v1179
    %v1252 = vpop.f32.mrb[0].mxu0
    %v1253 = vadd.f32 0.0, %v1252
    %v1254 = vpop.f32.mrb[0].mxu0
    %1255 = vdwg.mxu0
    %v1256 = vadd.f32 %v1167, %v1248
    %v1257 = vadd.f32 %v1172, %v1253
    %v1259 = vlaneseq
    %v1260 = vshrl.u32 %v1259, 7
    %v1261 = vsub.s32 0, %v1260
    %v1262 = vrot.slane %v1010, %v1261
    %v1264 = vadd.f32 %v1256, %v1262
    %v1265 = vadd.f32 %v1257, %v1262
    %v1267 = vsel %vm352, %v761, 0
    %1269 = vmatprep.subr.mxu0 0.0
    %1270 = vmatpush1.msra.mxu0 %v1005
    %1271 = vmatprep.subr.mxu0 0.0
    %1272 = vmatpush1.msra.mxu0 %v1006
    %1273 = vmatprep.subr.mxu0 0.0
    %1274 = vmatpush1.msra.mxu0 %v1007
    %1275 = vmatprep.subr.mxu0 0.0
    %1276 = vmatpush1.msra.mxu0 %v1008
    %1277 = vmatprep.subr.mxu0 0.0
    %1278 = vmatpush1.msra.mxu0 0.0
    %1279 = vmatprep.subr.mxu0 0.0
    %1280 = vmatpush1.msra.mxu0 0.0
    %1281 = vmatprep.subr.mxu0 0.0
    %1282 = vmatpush1.msra.mxu0 0.0
    %1283 = vmatprep.subr.mxu0 0.0
    %1284 = vmatpush1.msra.mxu0 0.0
    %1285 = vmatprep.subr.mxu0 0.0
    %1286 = vmatpush1.msra.mxu0 0.0
    %1287 = vmatprep.subr.mxu0 0.0
    %1288 = vmatpush1.msra.mxu0 0.0
    %1289 = vmatprep.subr.mxu0 0.0
    %1290 = vmatpush1.msra.mxu0 0.0
    %1291 = vmatprep.subr.mxu0 0.0
    %1292 = vmatpush1.msra.mxu0 0.0
    %1293 = vmatprep.subr.mxu0 0.0
    %1294 = vmatpush1.msra.mxu0 0.0
    %1295 = vmatprep.subr.mxu0 0.0
    %1296 = vmatpush1.msra.mxu0 0.0
    %1297 = vmatprep.subr.mxu0 0.0
    %1298 = vmatpush1.msra.mxu0 0.0
    %1299 = vmatprep.subr.mxu0 0.0
    %1300 = vmatpush1.msra.mxu0 0.0
    %1301 = vmatprep.subr.mxu0 0.0
    %1302 = vmatpush1.msra.mxu0 0.0
    %1303 = vmatprep.subr.mxu0 0.0
    %1304 = vmatpush1.msra.mxu0 0.0
    %1305 = vmatprep.subr.mxu0 0.0
    %1306 = vmatpush1.msra.mxu0 0.0
    %1307 = vmatprep.subr.mxu0 0.0
    %1308 = vmatpush1.msra.mxu0 0.0
    %1309 = vmatprep.subr.mxu0 0.0
    %1310 = vmatpush1.msra.mxu0 0.0
    %1311 = vmatprep.subr.mxu0 0.0
    %1312 = vmatpush1.msra.mxu0 0.0
    %1313 = vmatprep.subr.mxu0 0.0
    %1314 = vmatpush1.msra.mxu0 0.0
    %1315 = vmatprep.subr.mxu0 0.0
    %1316 = vmatpush1.msra.mxu0 0.0
    %1317 = vmatprep.subr.mxu0 0.0
    %1318 = vmatpush1.msra.mxu0 0.0
    %1319 = vmatprep.subr.mxu0 0.0
    %1320 = vmatpush1.msra.mxu0 0.0
    %1321 = vmatprep.subr.mxu0 0.0
    %1322 = vmatpush1.msra.mxu0 0.0
    %1323 = vmatprep.subr.mxu0 0.0
    %1324 = vmatpush1.msra.mxu0 0.0
    %1325 = vmatprep.subr.mxu0 0.0
    %1326 = vmatpush1.msra.mxu0 0.0
    %1327 = vmatprep.subr.mxu0 0.0
    %1328 = vmatpush1.msra.mxu0 0.0
    %1329 = vmatprep.subr.mxu0 0.0
    %1330 = vmatpush1.msra.mxu0 0.0
    %1331 = vmatprep.subr.mxu0 0.0
    %1332 = vmatpush1.msra.mxu0 0.0
    %1333 = vmatprep.mubr.f32.mxu0 0.0
    %1334 = vmatmul.mubr.f32.gmra.mrb[0].mxu0 %v1267
    %v1335 = vpop.f32.mrb[0].mxu0
    %v1336 = vadd.f32 0.0, %v1335
    %v1337 = vpop.f32.mrb[0].mxu0
    %1338 = vdwg.mxu0
    %v1340 = vsel %vm352, %v986, 0
    %1342 = vmatprep.subr.mxu0 0.0
    %1343 = vmatpush1.msra.mxu0 %v1001
    %1344 = vmatprep.subr.mxu0 0.0
    %1345 = vmatpush1.msra.mxu0 %v1002
    %1346 = vmatprep.subr.mxu0 0.0
    %1347 = vmatpush1.msra.mxu0 %v1003
    %1348 = vmatprep.subr.mxu0 0.0
    %1349 = vmatpush1.msra.mxu0 %v1004
    %1350 = vmatprep.subr.mxu0 0.0
    %1351 = vmatpush1.msra.mxu0 0.0
    %1352 = vmatprep.subr.mxu0 0.0
    %1353 = vmatpush1.msra.mxu0 0.0
    %1354 = vmatprep.subr.mxu0 0.0
    %1355 = vmatpush1.msra.mxu0 0.0
    %1356 = vmatprep.subr.mxu0 0.0
    %1357 = vmatpush1.msra.mxu0 0.0
    %1358 = vmatprep.subr.mxu0 0.0
    %1359 = vmatpush1.msra.mxu0 0.0
    %1360 = vmatprep.subr.mxu0 0.0
    %1361 = vmatpush1.msra.mxu0 0.0
    %1362 = vmatprep.subr.mxu0 0.0
    %1363 = vmatpush1.msra.mxu0 0.0
    %1364 = vmatprep.subr.mxu0 0.0
    %1365 = vmatpush1.msra.mxu0 0.0
    %1366 = vmatprep.subr.mxu0 0.0
    %1367 = vmatpush1.msra.mxu0 0.0
    %1368 = vmatprep.subr.mxu0 0.0
    %1369 = vmatpush1.msra.mxu0 0.0
    %1370 = vmatprep.subr.mxu0 0.0
    %1371 = vmatpush1.msra.mxu0 0.0
    %1372 = vmatprep.subr.mxu0 0.0
    %1373 = vmatpush1.msra.mxu0 0.0
    %1374 = vmatprep.subr.mxu0 0.0
    %1375 = vmatpush1.msra.mxu0 0.0
    %1376 = vmatprep.subr.mxu0 0.0
    %1377 = vmatpush1.msra.mxu0 0.0
    %1378 = vmatprep.subr.mxu0 0.0
    %1379 = vmatpush1.msra.mxu0 0.0
    %1380 = vmatprep.subr.mxu0 0.0
    %1381 = vmatpush1.msra.mxu0 0.0
    %1382 = vmatprep.subr.mxu0 0.0
    %1383 = vmatpush1.msra.mxu0 0.0
    %1384 = vmatprep.subr.mxu0 0.0
    %1385 = vmatpush1.msra.mxu0 0.0
    %1386 = vmatprep.subr.mxu0 0.0
    %1387 = vmatpush1.msra.mxu0 0.0
    %1388 = vmatprep.subr.mxu0 0.0
    %1389 = vmatpush1.msra.mxu0 0.0
    %1390 = vmatprep.subr.mxu0 0.0
    %1391 = vmatpush1.msra.mxu0 0.0
    %1392 = vmatprep.subr.mxu0 0.0
    %1393 = vmatpush1.msra.mxu0 0.0
    %1394 = vmatprep.subr.mxu0 0.0
    %1395 = vmatpush1.msra.mxu0 0.0
    %1396 = vmatprep.subr.mxu0 0.0
    %1397 = vmatpush1.msra.mxu0 0.0
    %1398 = vmatprep.subr.mxu0 0.0
    %1399 = vmatpush1.msra.mxu0 0.0
    %1400 = vmatprep.subr.mxu0 0.0
    %1401 = vmatpush1.msra.mxu0 0.0
    %1402 = vmatprep.subr.mxu0 0.0
    %1403 = vmatpush1.msra.mxu0 0.0
    %1404 = vmatprep.subr.mxu0 0.0
    %1405 = vmatpush1.msra.mxu0 0.0
    %1406 = vmatprep.mubr.f32.mxu0 0.0
    %1407 = vmatmul.mubr.f32.gmra.mrb[0].mxu0 %v1340
    %v1408 = vpop.f32.mrb[0].mxu0
    %v1409 = vadd.f32 %v1336, %v1408
    %v1410 = vpop.f32.mrb[0].mxu0
    %1411 = vdwg.mxu0
    %v1413 = vlaneseq
    %v1414 = vshrl.u32 %v1413, 7
    %v1415 = vsub.s32 0, %v1414
    %v1416 = vrot.slane %v1012, %v1415
    %v1418 = vadd.f32 %v1409, %v1416
    %s1419 = scalar_lea.vmem %s8, 192
    %v1420 = vld [vmem:[%s1419] sm:$0xff]
    %v1421 = vld [vmem:[%s1419 + $0x8] sm:$0xff]
    %v1422 = vld [vmem:[%s1419 + $0x10] sm:$0xff]
    %v1423 = vld [vmem:[%s1419 + $0x18] sm:$0xff]
    %v1424 = vld [vmem:[%s1419 + $0x20] sm:$0xff]
    %v1425 = vld [vmem:[%s1419 + $0x28] sm:$0xff]
    %v1426 = vld [vmem:[%s1419 + $0x30] sm:$0xff]
    %v1427 = vld [vmem:[%s1419 + $0x38] sm:$0xff]
    %v1428 = vld [vmem:[%s1419 + $0x40] sm:$0xff]
    %v1429 = vld [vmem:[%s1419 + $0x48] sm:$0xff]
    %v1430 = vld [vmem:[%s1419 + $0x50] sm:$0xff]
    %v1431 = vld [vmem:[%s1419 + $0x58] sm:$0xff]
    %s1432 = scalar_lea.vmem %s10, 128
    %v1433 = vld [vmem:[%s1432] sm:$0xff]
    %v1434 = vld [vmem:[%s1432 + $0x8] sm:$0xff]
    %v1435 = vld [vmem:[%s1432 + $0x10] sm:$0xff]
    %v1436 = vld [vmem:[%s1432 + $0x18] sm:$0xff]
    %v1437 = vld [vmem:[%s1432 + $0x20] sm:$0xff]
    %v1438 = vld [vmem:[%s1432 + $0x28] sm:$0xff]
    %v1439 = vld [vmem:[%s1432 + $0x30] sm:$0xff]
    %v1440 = vld [vmem:[%s1432 + $0x38] sm:$0xff]
    %s1441 = scalar_lea.vmem %s9, 2
    %v1442 = vld [vmem:[%s1441] sm:$0x1]
    %s1443 = scalar_lea.vmem %s11, 2
    %v1444 = vld [vmem:[%s1443] sm:$0x1]
    %1445 = vmatprep.subr.mxu0 0.0
    %1446 = vmatpush1.msra.mxu0 %v1424
    %1447 = vmatprep.subr.mxu0 0.0
    %1448 = vmatpush1.msra.mxu0 %v1425
    %1449 = vmatprep.subr.mxu0 0.0
    %1450 = vmatpush1.msra.mxu0 %v1426
    %1451 = vmatprep.subr.mxu0 0.0
    %1452 = vmatpush1.msra.mxu0 %v1427
    %1453 = vmatprep.subr.mxu0 0.0
    %1454 = vmatpush1.msra.mxu0 0.0
    %1455 = vmatprep.subr.mxu0 0.0
    %1456 = vmatpush1.msra.mxu0 0.0
    %1457 = vmatprep.subr.mxu0 0.0
    %1458 = vmatpush1.msra.mxu0 0.0
    %1459 = vmatprep.subr.mxu0 0.0
    %1460 = vmatpush1.msra.mxu0 0.0
    %1461 = vmatprep.subr.mxu0 0.0
    %1462 = vmatpush1.msra.mxu0 0.0
    %1463 = vmatprep.subr.mxu0 0.0
    %1464 = vmatpush1.msra.mxu0 0.0
    %1465 = vmatprep.subr.mxu0 0.0
    %1466 = vmatpush1.msra.mxu0 0.0
    %1467 = vmatprep.subr.mxu0 0.0
    %1468 = vmatpush1.msra.mxu0 0.0
    %1469 = vmatprep.subr.mxu0 0.0
    %1470 = vmatpush1.msra.mxu0 0.0
    %1471 = vmatprep.subr.mxu0 0.0
    %1472 = vmatpush1.msra.mxu0 0.0
    %1473 = vmatprep.subr.mxu0 0.0
    %1474 = vmatpush1.msra.mxu0 0.0
    %1475 = vmatprep.subr.mxu0 0.0
    %1476 = vmatpush1.msra.mxu0 0.0
    %1477 = vmatprep.subr.mxu0 0.0
    %1478 = vmatpush1.msra.mxu0 0.0
    %1479 = vmatprep.subr.mxu0 0.0
    %1480 = vmatpush1.msra.mxu0 0.0
    %1481 = vmatprep.subr.mxu0 0.0
    %1482 = vmatpush1.msra.mxu0 0.0
    %1483 = vmatprep.subr.mxu0 0.0
    %1484 = vmatpush1.msra.mxu0 0.0
    %1485 = vmatprep.subr.mxu0 0.0
    %1486 = vmatpush1.msra.mxu0 0.0
    %1487 = vmatprep.subr.mxu0 0.0
    %1488 = vmatpush1.msra.mxu0 0.0
    %1489 = vmatprep.subr.mxu0 0.0
    %1490 = vmatpush1.msra.mxu0 0.0
    %1491 = vmatprep.subr.mxu0 0.0
    %1492 = vmatpush1.msra.mxu0 0.0
    %1493 = vmatprep.subr.mxu0 0.0
    %1494 = vmatpush1.msra.mxu0 0.0
    %1495 = vmatprep.subr.mxu0 0.0
    %1496 = vmatpush1.msra.mxu0 0.0
    %1497 = vmatprep.subr.mxu0 0.0
    %1498 = vmatpush1.msra.mxu0 0.0
    %1499 = vmatprep.subr.mxu0 0.0
    %1500 = vmatpush1.msra.mxu0 0.0
    %1501 = vmatprep.subr.mxu0 0.0
    %1502 = vmatpush1.msra.mxu0 0.0
    %1503 = vmatprep.subr.mxu0 0.0
    %1504 = vmatpush1.msra.mxu0 0.0
    %1505 = vmatprep.subr.mxu0 0.0
    %1506 = vmatpush1.msra.mxu0 0.0
    %1507 = vmatprep.subr.mxu0 0.0
    %1508 = vmatpush1.msra.mxu0 0.0
    %1509 = vmatprep.mubr.f32.mxu0 0.0
    %1510 = vmatmul.mubr.f32.gmra.mrb[0].mxu0 %v354
    %v1511 = vpop.f32.mrb[0].mxu0
    %v1512 = vadd.f32 0.0, %v1511
    %v1513 = vpop.f32.mrb[0].mxu0
    %1514 = vmatprep.mubr.f32.mxu0 0.0
    %1515 = vmatmul.mubr.f32.gmra.mrb[0].mxu0 %v357
    %v1516 = vpop.f32.mrb[0].mxu0
    %v1517 = vadd.f32 0.0, %v1516
    %v1518 = vpop.f32.mrb[0].mxu0
    %1519 = vdwg.mxu0
    %1520 = vmatprep.subr.mxu0 0.0
    %1521 = vmatpush1.msra.mxu0 %v1420
    %1522 = vmatprep.subr.mxu0 0.0
    %1523 = vmatpush1.msra.mxu0 %v1421
    %1524 = vmatprep.subr.mxu0 0.0
    %1525 = vmatpush1.msra.mxu0 %v1422
    %1526 = vmatprep.subr.mxu0 0.0
    %1527 = vmatpush1.msra.mxu0 %v1423
    %1528 = vmatprep.subr.mxu0 0.0
    %1529 = vmatpush1.msra.mxu0 0.0
    %1530 = vmatprep.subr.mxu0 0.0
    %1531 = vmatpush1.msra.mxu0 0.0
    %1532 = vmatprep.subr.mxu0 0.0
    %1533 = vmatpush1.msra.mxu0 0.0
    %1534 = vmatprep.subr.mxu0 0.0
    %1535 = vmatpush1.msra.mxu0 0.0
    %1536 = vmatprep.subr.mxu0 0.0
    %1537 = vmatpush1.msra.mxu0 0.0
    %1538 = vmatprep.subr.mxu0 0.0
    %1539 = vmatpush1.msra.mxu0 0.0
    %1540 = vmatprep.subr.mxu0 0.0
    %1541 = vmatpush1.msra.mxu0 0.0
    %1542 = vmatprep.subr.mxu0 0.0
    %1543 = vmatpush1.msra.mxu0 0.0
    %1544 = vmatprep.subr.mxu0 0.0
    %1545 = vmatpush1.msra.mxu0 0.0
    %1546 = vmatprep.subr.mxu0 0.0
    %1547 = vmatpush1.msra.mxu0 0.0
    %1548 = vmatprep.subr.mxu0 0.0
    %1549 = vmatpush1.msra.mxu0 0.0
    %1550 = vmatprep.subr.mxu0 0.0
    %1551 = vmatpush1.msra.mxu0 0.0
    %1552 = vmatprep.subr.mxu0 0.0
    %1553 = vmatpush1.msra.mxu0 0.0
    %1554 = vmatprep.subr.mxu0 0.0
    %1555 = vmatpush1.msra.mxu0 0.0
    %1556 = vmatprep.subr.mxu0 0.0
    %1557 = vmatpush1.msra.mxu0 0.0
    %1558 = vmatprep.subr.mxu0 0.0
    %1559 = vmatpush1.msra.mxu0 0.0
    %1560 = vmatprep.subr.mxu0 0.0
    %1561 = vmatpush1.msra.mxu0 0.0
    %1562 = vmatprep.subr.mxu0 0.0
    %1563 = vmatpush1.msra.mxu0 0.0
    %1564 = vmatprep.subr.mxu0 0.0
    %1565 = vmatpush1.msra.mxu0 0.0
    %1566 = vmatprep.subr.mxu0 0.0
    %1567 = vmatpush1.msra.mxu0 0.0
    %1568 = vmatprep.subr.mxu0 0.0
    %1569 = vmatpush1.msra.mxu0 0.0
    %1570 = vmatprep.subr.mxu0 0.0
    %1571 = vmatpush1.msra.mxu0 0.0
    %1572 = vmatprep.subr.mxu0 0.0
    %1573 = vmatpush1.msra.mxu0 0.0
    %1574 = vmatprep.subr.mxu0 0.0
    %1575 = vmatpush1.msra.mxu0 0.0
    %1576 = vmatprep.subr.mxu0 0.0
    %1577 = vmatpush1.msra.mxu0 0.0
    %1578 = vmatprep.subr.mxu0 0.0
    %1579 = vmatpush1.msra.mxu0 0.0
    %1580 = vmatprep.subr.mxu0 0.0
    %1581 = vmatpush1.msra.mxu0 0.0
    %1582 = vmatprep.subr.mxu0 0.0
    %1583 = vmatpush1.msra.mxu0 0.0
    %1584 = vmatprep.mubr.f32.mxu0 0.0
    %1585 = vmatmul.mubr.f32.gmra.mrb[0].mxu0 %v435
    %v1586 = vpop.f32.mrb[0].mxu0
    %v1587 = vadd.f32 %v1512, %v1586
    %v1588 = vpop.f32.mrb[0].mxu0
    %1589 = vmatprep.mubr.f32.mxu0 0.0
    %1590 = vmatmul.mubr.f32.gmra.mrb[0].mxu0 %v438
    %v1591 = vpop.f32.mrb[0].mxu0
    %v1592 = vadd.f32 %v1517, %v1591
    %v1593 = vpop.f32.mrb[0].mxu0
    %1594 = vdwg.mxu0
    %1595 = vmatprep.subr.mxu0 0.0
    %1596 = vmatpush1.msra.mxu0 %v1428
    %1597 = vmatprep.subr.mxu0 0.0
    %1598 = vmatpush1.msra.mxu0 %v1429
    %1599 = vmatprep.subr.mxu0 0.0
    %1600 = vmatpush1.msra.mxu0 %v1430
    %1601 = vmatprep.subr.mxu0 0.0
    %1602 = vmatpush1.msra.mxu0 %v1431
    %1603 = vmatprep.subr.mxu0 0.0
    %1604 = vmatpush1.msra.mxu0 0.0
    %1605 = vmatprep.subr.mxu0 0.0
    %1606 = vmatpush1.msra.mxu0 0.0
    %1607 = vmatprep.subr.mxu0 0.0
    %1608 = vmatpush1.msra.mxu0 0.0
    %1609 = vmatprep.subr.mxu0 0.0
    %1610 = vmatpush1.msra.mxu0 0.0
    %1611 = vmatprep.subr.mxu0 0.0
    %1612 = vmatpush1.msra.mxu0 0.0
    %1613 = vmatprep.subr.mxu0 0.0
    %1614 = vmatpush1.msra.mxu0 0.0
    %1615 = vmatprep.subr.mxu0 0.0
    %1616 = vmatpush1.msra.mxu0 0.0
    %1617 = vmatprep.subr.mxu0 0.0
    %1618 = vmatpush1.msra.mxu0 0.0
    %1619 = vmatprep.subr.mxu0 0.0
    %1620 = vmatpush1.msra.mxu0 0.0
    %1621 = vmatprep.subr.mxu0 0.0
    %1622 = vmatpush1.msra.mxu0 0.0
    %1623 = vmatprep.subr.mxu0 0.0
    %1624 = vmatpush1.msra.mxu0 0.0
    %1625 = vmatprep.subr.mxu0 0.0
    %1626 = vmatpush1.msra.mxu0 0.0
    %1627 = vmatprep.subr.mxu0 0.0
    %1628 = vmatpush1.msra.mxu0 0.0
    %1629 = vmatprep.subr.mxu0 0.0
    %1630 = vmatpush1.msra.mxu0 0.0
    %1631 = vmatprep.subr.mxu0 0.0
    %1632 = vmatpush1.msra.mxu0 0.0
    %1633 = vmatprep.subr.mxu0 0.0
    %1634 = vmatpush1.msra.mxu0 0.0
    %1635 = vmatprep.subr.mxu0 0.0
    %1636 = vmatpush1.msra.mxu0 0.0
    %1637 = vmatprep.subr.mxu0 0.0
    %1638 = vmatpush1.msra.mxu0 0.0
    %1639 = vmatprep.subr.mxu0 0.0
    %1640 = vmatpush1.msra.mxu0 0.0
    %1641 = vmatprep.subr.mxu0 0.0
    %1642 = vmatpush1.msra.mxu0 0.0
    %1643 = vmatprep.subr.mxu0 0.0
    %1644 = vmatpush1.msra.mxu0 0.0
    %1645 = vmatprep.subr.mxu0 0.0
    %1646 = vmatpush1.msra.mxu0 0.0
    %1647 = vmatprep.subr.mxu0 0.0
    %1648 = vmatpush1.msra.mxu0 0.0
    %1649 = vmatprep.subr.mxu0 0.0
    %1650 = vmatpush1.msra.mxu0 0.0
    %1651 = vmatprep.subr.mxu0 0.0
    %1652 = vmatpush1.msra.mxu0 0.0
    %1653 = vmatprep.subr.mxu0 0.0
    %1654 = vmatpush1.msra.mxu0 0.0
    %1655 = vmatprep.subr.mxu0 0.0
    %1656 = vmatpush1.msra.mxu0 0.0
    %1657 = vmatprep.subr.mxu0 0.0
    %1658 = vmatpush1.msra.mxu0 0.0
    %1659 = vmatprep.mubr.f32.mxu0 0.0
    %1660 = vmatmul.mubr.f32.gmra.mrb[0].mxu0 %v516
    %v1661 = vpop.f32.mrb[0].mxu0
    %v1662 = vadd.f32 0.0, %v1661
    %v1663 = vpop.f32.mrb[0].mxu0
    %1664 = vmatprep.mubr.f32.mxu0 0.0
    %1665 = vmatmul.mubr.f32.gmra.mrb[0].mxu0 %v519
    %v1666 = vpop.f32.mrb[0].mxu0
    %v1667 = vadd.f32 0.0, %v1666
    %v1668 = vpop.f32.mrb[0].mxu0
    %1669 = vdwg.mxu0
    %v1670 = vadd.f32 %v1587, %v1662
    %v1671 = vadd.f32 %v1592, %v1667
    %v1673 = vlaneseq
    %v1674 = vshrl.u32 %v1673, 7
    %v1675 = vsub.s32 0, %v1674
    %v1676 = vrot.slane %v1442, %v1675
    %v1678 = vadd.f32 %v1670, %v1676
    %v1679 = vadd.f32 %v1671, %v1676
    %1680 = vmatprep.subr.mxu0 0.0
    %1681 = vmatpush1.msra.mxu0 %v1437
    %1682 = vmatprep.subr.mxu0 0.0
    %1683 = vmatpush1.msra.mxu0 %v1438
    %1684 = vmatprep.subr.mxu0 0.0
    %1685 = vmatpush1.msra.mxu0 %v1439
    %1686 = vmatprep.subr.mxu0 0.0
    %1687 = vmatpush1.msra.mxu0 %v1440
    %1688 = vmatprep.subr.mxu0 0.0
    %1689 = vmatpush1.msra.mxu0 0.0
    %1690 = vmatprep.subr.mxu0 0.0
    %1691 = vmatpush1.msra.mxu0 0.0
    %1692 = vmatprep.subr.mxu0 0.0
    %1693 = vmatpush1.msra.mxu0 0.0
    %1694 = vmatprep.subr.mxu0 0.0
    %1695 = vmatpush1.msra.mxu0 0.0
    %1696 = vmatprep.subr.mxu0 0.0
    %1697 = vmatpush1.msra.mxu0 0.0
    %1698 = vmatprep.subr.mxu0 0.0
    %1699 = vmatpush1.msra.mxu0 0.0
    %1700 = vmatprep.subr.mxu0 0.0
    %1701 = vmatpush1.msra.mxu0 0.0
    %1702 = vmatprep.subr.mxu0 0.0
    %1703 = vmatpush1.msra.mxu0 0.0
    %1704 = vmatprep.subr.mxu0 0.0
    %1705 = vmatpush1.msra.mxu0 0.0
    %1706 = vmatprep.subr.mxu0 0.0
    %1707 = vmatpush1.msra.mxu0 0.0
    %1708 = vmatprep.subr.mxu0 0.0
    %1709 = vmatpush1.msra.mxu0 0.0
    %1710 = vmatprep.subr.mxu0 0.0
    %1711 = vmatpush1.msra.mxu0 0.0
    %1712 = vmatprep.subr.mxu0 0.0
    %1713 = vmatpush1.msra.mxu0 0.0
    %1714 = vmatprep.subr.mxu0 0.0
    %1715 = vmatpush1.msra.mxu0 0.0
    %1716 = vmatprep.subr.mxu0 0.0
    %1717 = vmatpush1.msra.mxu0 0.0
    %1718 = vmatprep.subr.mxu0 0.0
    %1719 = vmatpush1.msra.mxu0 0.0
    %1720 = vmatprep.subr.mxu0 0.0
    %1721 = vmatpush1.msra.mxu0 0.0
    %1722 = vmatprep.subr.mxu0 0.0
    %1723 = vmatpush1.msra.mxu0 0.0
    %1724 = vmatprep.subr.mxu0 0.0
    %1725 = vmatpush1.msra.mxu0 0.0
    %1726 = vmatprep.subr.mxu0 0.0
    %1727 = vmatpush1.msra.mxu0 0.0
    %1728 = vmatprep.subr.mxu0 0.0
    %1729 = vmatpush1.msra.mxu0 0.0
    %1730 = vmatprep.subr.mxu0 0.0
    %1731 = vmatpush1.msra.mxu0 0.0
    %1732 = vmatprep.subr.mxu0 0.0
    %1733 = vmatpush1.msra.mxu0 0.0
    %1734 = vmatprep.subr.mxu0 0.0
    %1735 = vmatpush1.msra.mxu0 0.0
    %1736 = vmatprep.subr.mxu0 0.0
    %1737 = vmatpush1.msra.mxu0 0.0
    %1738 = vmatprep.subr.mxu0 0.0
    %1739 = vmatpush1.msra.mxu0 0.0
    %1740 = vmatprep.subr.mxu0 0.0
    %1741 = vmatpush1.msra.mxu0 0.0
    %1742 = vmatprep.subr.mxu0 0.0
    %1743 = vmatpush1.msra.mxu0 0.0
    %1744 = vmatprep.mubr.f32.mxu0 0.0
    %1745 = vmatmul.mubr.f32.gmra.mrb[0].mxu0 %v607
    %v1746 = vpop.f32.mrb[0].mxu0
    %v1747 = vadd.f32 0.0, %v1746
    %v1748 = vpop.f32.mrb[0].mxu0
    %1749 = vdwg.mxu0
    %1750 = vmatprep.subr.mxu0 0.0
    %1751 = vmatpush1.msra.mxu0 %v1433
    %1752 = vmatprep.subr.mxu0 0.0
    %1753 = vmatpush1.msra.mxu0 %v1434
    %1754 = vmatprep.subr.mxu0 0.0
    %1755 = vmatpush1.msra.mxu0 %v1435
    %1756 = vmatprep.subr.mxu0 0.0
    %1757 = vmatpush1.msra.mxu0 %v1436
    %1758 = vmatprep.subr.mxu0 0.0
    %1759 = vmatpush1.msra.mxu0 0.0
    %1760 = vmatprep.subr.mxu0 0.0
    %1761 = vmatpush1.msra.mxu0 0.0
    %1762 = vmatprep.subr.mxu0 0.0
    %1763 = vmatpush1.msra.mxu0 0.0
    %1764 = vmatprep.subr.mxu0 0.0
    %1765 = vmatpush1.msra.mxu0 0.0
    %1766 = vmatprep.subr.mxu0 0.0
    %1767 = vmatpush1.msra.mxu0 0.0
    %1768 = vmatprep.subr.mxu0 0.0
    %1769 = vmatpush1.msra.mxu0 0.0
    %1770 = vmatprep.subr.mxu0 0.0
    %1771 = vmatpush1.msra.mxu0 0.0
    %1772 = vmatprep.subr.mxu0 0.0
    %1773 = vmatpush1.msra.mxu0 0.0
    %1774 = vmatprep.subr.mxu0 0.0
    %1775 = vmatpush1.msra.mxu0 0.0
    %1776 = vmatprep.subr.mxu0 0.0
    %1777 = vmatpush1.msra.mxu0 0.0
    %1778 = vmatprep.subr.mxu0 0.0
    %1779 = vmatpush1.msra.mxu0 0.0
    %1780 = vmatprep.subr.mxu0 0.0
    %1781 = vmatpush1.msra.mxu0 0.0
    %1782 = vmatprep.subr.mxu0 0.0
    %1783 = vmatpush1.msra.mxu0 0.0
    %1784 = vmatprep.subr.mxu0 0.0
    %1785 = vmatpush1.msra.mxu0 0.0
    %1786 = vmatprep.subr.mxu0 0.0
    %1787 = vmatpush1.msra.mxu0 0.0
    %1788 = vmatprep.subr.mxu0 0.0
    %1789 = vmatpush1.msra.mxu0 0.0
    %1790 = vmatprep.subr.mxu0 0.0
    %1791 = vmatpush1.msra.mxu0 0.0
    %1792 = vmatprep.subr.mxu0 0.0
    %1793 = vmatpush1.msra.mxu0 0.0
    %1794 = vmatprep.subr.mxu0 0.0
    %1795 = vmatpush1.msra.mxu0 0.0
    %1796 = vmatprep.subr.mxu0 0.0
    %1797 = vmatpush1.msra.mxu0 0.0
    %1798 = vmatprep.subr.mxu0 0.0
    %1799 = vmatpush1.msra.mxu0 0.0
    %1800 = vmatprep.subr.mxu0 0.0
    %1801 = vmatpush1.msra.mxu0 0.0
    %1802 = vmatprep.subr.mxu0 0.0
    %1803 = vmatpush1.msra.mxu0 0.0
    %1804 = vmatprep.subr.mxu0 0.0
    %1805 = vmatpush1.msra.mxu0 0.0
    %1806 = vmatprep.subr.mxu0 0.0
    %1807 = vmatpush1.msra.mxu0 0.0
    %1808 = vmatprep.subr.mxu0 0.0
    %1809 = vmatpush1.msra.mxu0 0.0
    %1810 = vmatprep.subr.mxu0 0.0
    %1811 = vmatpush1.msra.mxu0 0.0
    %1812 = vmatprep.subr.mxu0 0.0
    %1813 = vmatpush1.msra.mxu0 0.0
    %1814 = vmatprep.mubr.f32.mxu0 0.0
    %1815 = vmatmul.mubr.f32.gmra.mrb[0].mxu0 %v680
    %v1816 = vpop.f32.mrb[0].mxu0
    %v1817 = vadd.f32 %v1747, %v1816
    %v1818 = vpop.f32.mrb[0].mxu0
    %1819 = vdwg.mxu0
    %v1821 = vlaneseq
    %v1822 = vshrl.u32 %v1821, 7
    %v1823 = vsub.s32 0, %v1822
    %v1824 = vrot.slane %v1444, %v1823
    %v1826 = vadd.f32 %v1817, %v1824
    %v1827 = vmax.f32 %v1678, 0.0
    %v1828 = vmax.f32 %v1679, 0.0
    %v1829 = vmax.f32 %v1826, 0.0
    %1830 = vmatprep.subr.mxu0 0.0
    %1831 = vmatpush1.msra.mxu0 %v1827
    %1832 = vmatprep.subr.mxu0 0.0
    %1833 = vmatpush1.msra.mxu0 %v1828
    %1834 = vmatprep.subr.mxu0 0.0
    %1835 = vmatpush1.msra.mxu0 0.0
    %1836 = vmatprep.subr.mxu0 0.0
    %1837 = vmatpush1.msra.mxu0 0.0
    %1838 = vmatprep.subr.mxu0 0.0
    %1839 = vmatpush1.msra.mxu0 0.0
    %1840 = vmatprep.subr.mxu0 0.0
    %1841 = vmatpush1.msra.mxu0 0.0
    %1842 = vmatprep.subr.mxu0 0.0
    %1843 = vmatpush1.msra.mxu0 0.0
    %1844 = vmatprep.subr.mxu0 0.0
    %1845 = vmatpush1.msra.mxu0 0.0
    %1846 = vmatprep.subr.mxu0 0.0
    %1847 = vmatpush1.msra.mxu0 0.0
    %1848 = vmatprep.subr.mxu0 0.0
    %1849 = vmatpush1.msra.mxu0 0.0
    %1850 = vmatprep.subr.mxu0 0.0
    %1851 = vmatpush1.msra.mxu0 0.0
    %1852 = vmatprep.subr.mxu0 0.0
    %1853 = vmatpush1.msra.mxu0 0.0
    %1854 = vmatprep.subr.mxu0 0.0
    %1855 = vmatpush1.msra.mxu0 0.0
    %1856 = vmatprep.subr.mxu0 0.0
    %1857 = vmatpush1.msra.mxu0 0.0
    %1858 = vmatprep.subr.mxu0 0.0
    %1859 = vmatpush1.msra.mxu0 0.0
    %1860 = vmatprep.subr.mxu0 0.0
    %1861 = vmatpush1.msra.mxu0 0.0
    %1862 = vmatprep.subr.mxu0 0.0
    %1863 = vmatpush1.msra.mxu0 0.0
    %1864 = vmatprep.subr.mxu0 0.0
    %1865 = vmatpush1.msra.mxu0 0.0
    %1866 = vmatprep.subr.mxu0 0.0
    %1867 = vmatpush1.msra.mxu0 0.0
    %1868 = vmatprep.subr.mxu0 0.0
    %1869 = vmatpush1.msra.mxu0 0.0
    %1870 = vmatprep.subr.mxu0 0.0
    %1871 = vmatpush1.msra.mxu0 0.0
    %1872 = vmatprep.subr.mxu0 0.0
    %1873 = vmatpush1.msra.mxu0 0.0
    %1874 = vmatprep.subr.mxu0 0.0
    %1875 = vmatpush1.msra.mxu0 0.0
    %1876 = vmatprep.subr.mxu0 0.0
    %1877 = vmatpush1.msra.mxu0 0.0
    %1878 = vmatprep.subr.mxu0 0.0
    %1879 = vmatpush1.msra.mxu0 0.0
    %1880 = vmatprep.subr.mxu0 0.0
    %1881 = vmatpush1.msra.mxu0 0.0
    %1882 = vmatprep.subr.mxu0 0.0
    %1883 = vmatpush1.msra.mxu0 0.0
    %1884 = vmatprep.subr.mxu0 0.0
    %1885 = vmatpush1.msra.mxu0 0.0
    %1886 = vmatprep.subr.mxu0 0.0
    %1887 = vmatpush1.msra.mxu0 0.0
    %1888 = vmatprep.subr.mxu0 0.0
    %1889 = vmatpush1.msra.mxu0 0.0
    %1890 = vmatprep.subr.mxu0 0.0
    %1891 = vmatpush1.msra.mxu0 0.0
    %1892 = vmatprep.subr.mxu0 0.0
    %1893 = vmatpush1.msra.mxu0 0.0
    %1894 = vmatprep.mubr.f32.mxu0 0.0
    %1895 = vmatmul.mubr.f32.gmra.mrb[0].mxu0 %v65
    %v1896 = vpop.f32.mrb[0].mxu0
    %v1897 = vadd.f32 0.0, %v1896
    %v1898 = vpop.f32.mrb[0].mxu0
    %1899 = vmatprep.mubr.f32.mxu0 0.0
    %1900 = vmatmul.mubr.f32.gmra.mrb[0].mxu0 %v68
    %v1901 = vpop.f32.mrb[0].mxu0
    %v1902 = vadd.f32 0.0, %v1901
    %v1903 = vpop.f32.mrb[0].mxu0
    %1904 = vdwg.mxu0
    %v1905 = vmul.f32 %v1897, %v148
    %v1906 = vmul.f32 %v1902, %v153
    %1907 = vmatprep.subr.mxu0 0.0
    %1908 = vmatpush1.msra.mxu0 %v1829
    %1909 = vmatprep.subr.mxu0 0.0
    %1910 = vmatpush1.msra.mxu0 0.0
    %1911 = vmatprep.subr.mxu0 0.0
    %1912 = vmatpush1.msra.mxu0 0.0
    %1913 = vmatprep.subr.mxu0 0.0
    %1914 = vmatpush1.msra.mxu0 0.0
    %1915 = vmatprep.subr.mxu0 0.0
    %1916 = vmatpush1.msra.mxu0 0.0
    %1917 = vmatprep.subr.mxu0 0.0
    %1918 = vmatpush1.msra.mxu0 0.0
    %1919 = vmatprep.subr.mxu0 0.0
    %1920 = vmatpush1.msra.mxu0 0.0
    %1921 = vmatprep.subr.mxu0 0.0
    %1922 = vmatpush1.msra.mxu0 0.0
    %1923 = vmatprep.subr.mxu0 0.0
    %1924 = vmatpush1.msra.mxu0 0.0
    %1925 = vmatprep.subr.mxu0 0.0
    %1926 = vmatpush1.msra.mxu0 0.0
    %1927 = vmatprep.subr.mxu0 0.0
    %1928 = vmatpush1.msra.mxu0 0.0
    %1929 = vmatprep.subr.mxu0 0.0
    %1930 = vmatpush1.msra.mxu0 0.0
    %1931 = vmatprep.subr.mxu0 0.0
    %1932 = vmatpush1.msra.mxu0 0.0
    %1933 = vmatprep.subr.mxu0 0.0
    %1934 = vmatpush1.msra.mxu0 0.0
    %1935 = vmatprep.subr.mxu0 0.0
    %1936 = vmatpush1.msra.mxu0 0.0
    %1937 = vmatprep.subr.mxu0 0.0
    %1938 = vmatpush1.msra.mxu0 0.0
    %1939 = vmatprep.subr.mxu0 0.0
    %1940 = vmatpush1.msra.mxu0 0.0
    %1941 = vmatprep.subr.mxu0 0.0
    %1942 = vmatpush1.msra.mxu0 0.0
    %1943 = vmatprep.subr.mxu0 0.0
    %1944 = vmatpush1.msra.mxu0 0.0
    %1945 = vmatprep.subr.mxu0 0.0
    %1946 = vmatpush1.msra.mxu0 0.0
    %1947 = vmatprep.subr.mxu0 0.0
    %1948 = vmatpush1.msra.mxu0 0.0
    %1949 = vmatprep.subr.mxu0 0.0
    %1950 = vmatpush1.msra.mxu0 0.0
    %1951 = vmatprep.subr.mxu0 0.0
    %1952 = vmatpush1.msra.mxu0 0.0
    %1953 = vmatprep.subr.mxu0 0.0
    %1954 = vmatpush1.msra.mxu0 0.0
    %1955 = vmatprep.subr.mxu0 0.0
    %1956 = vmatpush1.msra.mxu0 0.0
    %1957 = vmatprep.subr.mxu0 0.0
    %1958 = vmatpush1.msra.mxu0 0.0
    %1959 = vmatprep.subr.mxu0 0.0
    %1960 = vmatpush1.msra.mxu0 0.0
    %1961 = vmatprep.subr.mxu0 0.0
    %1962 = vmatpush1.msra.mxu0 0.0
    %1963 = vmatprep.subr.mxu0 0.0
    %1964 = vmatpush1.msra.mxu0 0.0
    %1965 = vmatprep.subr.mxu0 0.0
    %1966 = vmatpush1.msra.mxu0 0.0
    %1967 = vmatprep.subr.mxu0 0.0
    %1968 = vmatpush1.msra.mxu0 0.0
    %1969 = vmatprep.subr.mxu0 0.0
    %1970 = vmatpush1.msra.mxu0 0.0
    %1971 = vmatprep.mubr.f32.mxu0 0.0
    %1972 = vmatmul.mubr.f32.gmra.mrb[0].mxu0 %v159
    %v1973 = vpop.f32.mrb[0].mxu0
    %v1974 = vadd.f32 0.0, %v1973
    %v1975 = vpop.f32.mrb[0].mxu0
    %1976 = vmatprep.mubr.f32.mxu0 0.0
    %1977 = vmatmul.mubr.f32.gmra.mrb[0].mxu0 %v162
    %v1978 = vpop.f32.mrb[0].mxu0
    %v1979 = vadd.f32 0.0, %v1978
    %v1980 = vpop.f32.mrb[0].mxu0
    %1981 = vdwg.mxu0
    %v1982 = vmul.f32 %v1974, %v242
    %v1983 = vmul.f32 %v1979, %v247
    %1984 = vmatprep.subr.mxu0 0.0
    %1985 = vmatpush1.msra.mxu0 %v1827
    %1986 = vmatprep.subr.mxu0 0.0
    %1987 = vmatpush1.msra.mxu0 %v1828
    %1988 = vmatprep.subr.mxu0 0.0
    %1989 = vmatpush1.msra.mxu0 0.0
    %1990 = vmatprep.subr.mxu0 0.0
    %1991 = vmatpush1.msra.mxu0 0.0
    %1992 = vmatprep.subr.mxu0 0.0
    %1993 = vmatpush1.msra.mxu0 0.0
    %1994 = vmatprep.subr.mxu0 0.0
    %1995 = vmatpush1.msra.mxu0 0.0
    %1996 = vmatprep.subr.mxu0 0.0
    %1997 = vmatpush1.msra.mxu0 0.0
    %1998 = vmatprep.subr.mxu0 0.0
    %1999 = vmatpush1.msra.mxu0 0.0
    %2000 = vmatprep.subr.mxu0 0.0
    %2001 = vmatpush1.msra.mxu0 0.0
    %2002 = vmatprep.subr.mxu0 0.0
    %2003 = vmatpush1.msra.mxu0 0.0
    %2004 = vmatprep.subr.mxu0 0.0
    %2005 = vmatpush1.msra.mxu0 0.0
    %2006 = vmatprep.subr.mxu0 0.0
    %2007 = vmatpush1.msra.mxu0 0.0
    %2008 = vmatprep.subr.mxu0 0.0
    %2009 = vmatpush1.msra.mxu0 0.0
    %2010 = vmatprep.subr.mxu0 0.0
    %2011 = vmatpush1.msra.mxu0 0.0
    %2012 = vmatprep.subr.mxu0 0.0
    %2013 = vmatpush1.msra.mxu0 0.0
    %2014 = vmatprep.subr.mxu0 0.0
    %2015 = vmatpush1.msra.mxu0 0.0
    %2016 = vmatprep.subr.mxu0 0.0
    %2017 = vmatpush1.msra.mxu0 0.0
    %2018 = vmatprep.subr.mxu0 0.0
    %2019 = vmatpush1.msra.mxu0 0.0
    %2020 = vmatprep.subr.mxu0 0.0
    %2021 = vmatpush1.msra.mxu0 0.0
    %2022 = vmatprep.subr.mxu0 0.0
    %2023 = vmatpush1.msra.mxu0 0.0
    %2024 = vmatprep.subr.mxu0 0.0
    %2025 = vmatpush1.msra.mxu0 0.0
    %2026 = vmatprep.subr.mxu0 0.0
    %2027 = vmatpush1.msra.mxu0 0.0
    %2028 = vmatprep.subr.mxu0 0.0
    %2029 = vmatpush1.msra.mxu0 0.0
    %2030 = vmatprep.subr.mxu0 0.0
    %2031 = vmatpush1.msra.mxu0 0.0
    %2032 = vmatprep.subr.mxu0 0.0
    %2033 = vmatpush1.msra.mxu0 0.0
    %2034 = vmatprep.subr.mxu0 0.0
    %2035 = vmatpush1.msra.mxu0 0.0
    %2036 = vmatprep.subr.mxu0 0.0
    %2037 = vmatpush1.msra.mxu0 0.0
    %2038 = vmatprep.subr.mxu0 0.0
    %2039 = vmatpush1.msra.mxu0 0.0
    %2040 = vmatprep.subr.mxu0 0.0
    %2041 = vmatpush1.msra.mxu0 0.0
    %2042 = vmatprep.subr.mxu0 0.0
    %2043 = vmatpush1.msra.mxu0 0.0
    %2044 = vmatprep.subr.mxu0 0.0
    %2045 = vmatpush1.msra.mxu0 0.0
    %2046 = vmatprep.subr.mxu0 0.0
    %2047 = vmatpush1.msra.mxu0 0.0
    %2048 = vmatprep.mubr.f32.mxu0 0.0
    %2049 = vmatmul.mubr.f32.gmra.mrb[0].mxu0 %v252
    %v2050 = vpop.f32.mrb[0].mxu0
    %v2051 = vadd.f32 0.0, %v2050
    %v2052 = vpop.f32.mrb[0].mxu0
    %2053 = vdwg.mxu0
    %v2054 = vmul.f32 %v2051, %v327
    %s2055 = scalar_lea.vmem %s8, 288
    %v2056 = vld [vmem:[%s2055] sm:$0xff]
    %v2057 = vld [vmem:[%s2055 + $0x8] sm:$0xff]
    %v2058 = vld [vmem:[%s2055 + $0x10] sm:$0xff]
    %v2059 = vld [vmem:[%s2055 + $0x18] sm:$0xff]
    %v2060 = vld [vmem:[%s2055 + $0x20] sm:$0xff]
    %v2061 = vld [vmem:[%s2055 + $0x28] sm:$0xff]
    %v2062 = vld [vmem:[%s2055 + $0x30] sm:$0xff]
    %v2063 = vld [vmem:[%s2055 + $0x38] sm:$0xff]
    %v2064 = vld [vmem:[%s2055 + $0x40] sm:$0xff]
    %v2065 = vld [vmem:[%s2055 + $0x48] sm:$0xff]
    %v2066 = vld [vmem:[%s2055 + $0x50] sm:$0xff]
    %v2067 = vld [vmem:[%s2055 + $0x58] sm:$0xff]
    %s2068 = scalar_lea.vmem %s10, 192
    %v2069 = vld [vmem:[%s2068] sm:$0xff]
    %v2070 = vld [vmem:[%s2068 + $0x8] sm:$0xff]
    %v2071 = vld [vmem:[%s2068 + $0x10] sm:$0xff]
    %v2072 = vld [vmem:[%s2068 + $0x18] sm:$0xff]
    %v2073 = vld [vmem:[%s2068 + $0x20] sm:$0xff]
    %v2074 = vld [vmem:[%s2068 + $0x28] sm:$0xff]
    %v2075 = vld [vmem:[%s2068 + $0x30] sm:$0xff]
    %v2076 = vld [vmem:[%s2068 + $0x38] sm:$0xff]
    %s2077 = scalar_lea.vmem %s9, 3
    %v2078 = vld [vmem:[%s2077] sm:$0x1]
    %s2079 = scalar_lea.vmem %s11, 3
    %v2080 = vld [vmem:[%s2079] sm:$0x1]
    %v2082 = vsel %vm352, %v1982, 0
    %v2085 = vsel %vm352, %v1983, 0
    %2087 = vmatprep.subr.mxu0 0.0
    %2088 = vmatpush1.msra.mxu0 %v2060
    %2089 = vmatprep.subr.mxu0 0.0
    %2090 = vmatpush1.msra.mxu0 %v2061
    %2091 = vmatprep.subr.mxu0 0.0
    %2092 = vmatpush1.msra.mxu0 %v2062
    %2093 = vmatprep.subr.mxu0 0.0
    %2094 = vmatpush1.msra.mxu0 %v2063
    %2095 = vmatprep.subr.mxu0 0.0
    %2096 = vmatpush1.msra.mxu0 0.0
    %2097 = vmatprep.subr.mxu0 0.0
    %2098 = vmatpush1.msra.mxu0 0.0
    %2099 = vmatprep.subr.mxu0 0.0
    %2100 = vmatpush1.msra.mxu0 0.0
    %2101 = vmatprep.subr.mxu0 0.0
    %2102 = vmatpush1.msra.mxu0 0.0
    %2103 = vmatprep.subr.mxu0 0.0
    %2104 = vmatpush1.msra.mxu0 0.0
    %2105 = vmatprep.subr.mxu0 0.0
    %2106 = vmatpush1.msra.mxu0 0.0
    %2107 = vmatprep.subr.mxu0 0.0
    %2108 = vmatpush1.msra.mxu0 0.0
    %2109 = vmatprep.subr.mxu0 0.0
    %2110 = vmatpush1.msra.mxu0 0.0
    %2111 = vmatprep.subr.mxu0 0.0
    %2112 = vmatpush1.msra.mxu0 0.0
    %2113 = vmatprep.subr.mxu0 0.0
    %2114 = vmatpush1.msra.mxu0 0.0
    %2115 = vmatprep.subr.mxu0 0.0
    %2116 = vmatpush1.msra.mxu0 0.0
    %2117 = vmatprep.subr.mxu0 0.0
    %2118 = vmatpush1.msra.mxu0 0.0
    %2119 = vmatprep.subr.mxu0 0.0
    %2120 = vmatpush1.msra.mxu0 0.0
    %2121 = vmatprep.subr.mxu0 0.0
    %2122 = vmatpush1.msra.mxu0 0.0
    %2123 = vmatprep.subr.mxu0 0.0
    %2124 = vmatpush1.msra.mxu0 0.0
    %2125 = vmatprep.subr.mxu0 0.0
    %2126 = vmatpush1.msra.mxu0 0.0
    %2127 = vmatprep.subr.mxu0 0.0
    %2128 = vmatpush1.msra.mxu0 0.0
    %2129 = vmatprep.subr.mxu0 0.0
    %2130 = vmatpush1.msra.mxu0 0.0
    %2131 = vmatprep.subr.mxu0 0.0
    %2132 = vmatpush1.msra.mxu0 0.0
    %2133 = vmatprep.subr.mxu0 0.0
    %2134 = vmatpush1.msra.mxu0 0.0
    %2135 = vmatprep.subr.mxu0 0.0
    %2136 = vmatpush1.msra.mxu0 0.0
    %2137 = vmatprep.subr.mxu0 0.0
    %2138 = vmatpush1.msra.mxu0 0.0
    %2139 = vmatprep.subr.mxu0 0.0
    %2140 = vmatpush1.msra.mxu0 0.0
    %2141 = vmatprep.subr.mxu0 0.0
    %2142 = vmatpush1.msra.mxu0 0.0
    %2143 = vmatprep.subr.mxu0 0.0
    %2144 = vmatpush1.msra.mxu0 0.0
    %2145 = vmatprep.subr.mxu0 0.0
    %2146 = vmatpush1.msra.mxu0 0.0
    %2147 = vmatprep.subr.mxu0 0.0
    %2148 = vmatpush1.msra.mxu0 0.0
    %2149 = vmatprep.subr.mxu0 0.0
    %2150 = vmatpush1.msra.mxu0 0.0
    %2151 = vmatprep.mubr.f32.mxu0 0.0
    %2152 = vmatmul.mubr.f32.gmra.mrb[0].mxu0 %v2082
    %v2153 = vpop.f32.mrb[0].mxu0
    %v2154 = vadd.f32 0.0, %v2153
    %v2155 = vpop.f32.mrb[0].mxu0
    %2156 = vmatprep.mubr.f32.mxu0 0.0
    %2157 = vmatmul.mubr.f32.gmra.mrb[0].mxu0 %v2085
    %v2158 = vpop.f32.mrb[0].mxu0
    %v2159 = vadd.f32 0.0, %v2158
    %v2160 = vpop.f32.mrb[0].mxu0
    %2161 = vdwg.mxu0
    %v2163 = vsel %vm352, %v1905, 0
    %v2166 = vsel %vm352, %v1906, 0
    %2168 = vmatprep.subr.mxu0 0.0
    %2169 = vmatpush1.msra.mxu0 %v2056
    %2170 = vmatprep.subr.mxu0 0.0
    %2171 = vmatpush1.msra.mxu0 %v2057
    %2172 = vmatprep.subr.mxu0 0.0
    %2173 = vmatpush1.msra.mxu0 %v2058
    %2174 = vmatprep.subr.mxu0 0.0
    %2175 = vmatpush1.msra.mxu0 %v2059
    %2176 = vmatprep.subr.mxu0 0.0
    %2177 = vmatpush1.msra.mxu0 0.0
    %2178 = vmatprep.subr.mxu0 0.0
    %2179 = vmatpush1.msra.mxu0 0.0
    %2180 = vmatprep.subr.mxu0 0.0
    %2181 = vmatpush1.msra.mxu0 0.0
    %2182 = vmatprep.subr.mxu0 0.0
    %2183 = vmatpush1.msra.mxu0 0.0
    %2184 = vmatprep.subr.mxu0 0.0
    %2185 = vmatpush1.msra.mxu0 0.0
    %2186 = vmatprep.subr.mxu0 0.0
    %2187 = vmatpush1.msra.mxu0 0.0
    %2188 = vmatprep.subr.mxu0 0.0
    %2189 = vmatpush1.msra.mxu0 0.0
    %2190 = vmatprep.subr.mxu0 0.0
    %2191 = vmatpush1.msra.mxu0 0.0
    %2192 = vmatprep.subr.mxu0 0.0
    %2193 = vmatpush1.msra.mxu0 0.0
    %2194 = vmatprep.subr.mxu0 0.0
    %2195 = vmatpush1.msra.mxu0 0.0
    %2196 = vmatprep.subr.mxu0 0.0
    %2197 = vmatpush1.msra.mxu0 0.0
    %2198 = vmatprep.subr.mxu0 0.0
    %2199 = vmatpush1.msra.mxu0 0.0
    %2200 = vmatprep.subr.mxu0 0.0
    %2201 = vmatpush1.msra.mxu0 0.0
    %2202 = vmatprep.subr.mxu0 0.0
    %2203 = vmatpush1.msra.mxu0 0.0
    %2204 = vmatprep.subr.mxu0 0.0
    %2205 = vmatpush1.msra.mxu0 0.0
    %2206 = vmatprep.subr.mxu0 0.0
    %2207 = vmatpush1.msra.mxu0 0.0
    %2208 = vmatprep.subr.mxu0 0.0
    %2209 = vmatpush1.msra.mxu0 0.0
    %2210 = vmatprep.subr.mxu0 0.0
    %2211 = vmatpush1.msra.mxu0 0.0
    %2212 = vmatprep.subr.mxu0 0.0
    %2213 = vmatpush1.msra.mxu0 0.0
    %2214 = vmatprep.subr.mxu0 0.0
    %2215 = vmatpush1.msra.mxu0 0.0
    %2216 = vmatprep.subr.mxu0 0.0
    %2217 = vmatpush1.msra.mxu0 0.0
    %2218 = vmatprep.subr.mxu0 0.0
    %2219 = vmatpush1.msra.mxu0 0.0
    %2220 = vmatprep.subr.mxu0 0.0
    %2221 = vmatpush1.msra.mxu0 0.0
    %2222 = vmatprep.subr.mxu0 0.0
    %2223 = vmatpush1.msra.mxu0 0.0
    %2224 = vmatprep.subr.mxu0 0.0
    %2225 = vmatpush1.msra.mxu0 0.0
    %2226 = vmatprep.subr.mxu0 0.0
    %2227 = vmatpush1.msra.mxu0 0.0
    %2228 = vmatprep.subr.mxu0 0.0
    %2229 = vmatpush1.msra.mxu0 0.0
    %2230 = vmatprep.subr.mxu0 0.0
    %2231 = vmatpush1.msra.mxu0 0.0
    %2232 = vmatprep.mubr.f32.mxu0 0.0
    %2233 = vmatmul.mubr.f32.gmra.mrb[0].mxu0 %v2163
    %v2234 = vpop.f32.mrb[0].mxu0
    %v2235 = vadd.f32 %v2154, %v2234
    %v2236 = vpop.f32.mrb[0].mxu0
    %2237 = vmatprep.mubr.f32.mxu0 0.0
    %2238 = vmatmul.mubr.f32.gmra.mrb[0].mxu0 %v2166
    %v2239 = vpop.f32.mrb[0].mxu0
    %v2240 = vadd.f32 %v2159, %v2239
    %v2241 = vpop.f32.mrb[0].mxu0
    %2242 = vdwg.mxu0
    %v2244 = vsel %vm352, %v1827, 0
    %v2247 = vsel %vm352, %v1828, 0
    %2249 = vmatprep.subr.mxu0 0.0
    %2250 = vmatpush1.msra.mxu0 %v2064
    %2251 = vmatprep.subr.mxu0 0.0
    %2252 = vmatpush1.msra.mxu0 %v2065
    %2253 = vmatprep.subr.mxu0 0.0
    %2254 = vmatpush1.msra.mxu0 %v2066
    %2255 = vmatprep.subr.mxu0 0.0
    %2256 = vmatpush1.msra.mxu0 %v2067
    %2257 = vmatprep.subr.mxu0 0.0
    %2258 = vmatpush1.msra.mxu0 0.0
    %2259 = vmatprep.subr.mxu0 0.0
    %2260 = vmatpush1.msra.mxu0 0.0
    %2261 = vmatprep.subr.mxu0 0.0
    %2262 = vmatpush1.msra.mxu0 0.0
    %2263 = vmatprep.subr.mxu0 0.0
    %2264 = vmatpush1.msra.mxu0 0.0
    %2265 = vmatprep.subr.mxu0 0.0
    %2266 = vmatpush1.msra.mxu0 0.0
    %2267 = vmatprep.subr.mxu0 0.0
    %2268 = vmatpush1.msra.mxu0 0.0
    %2269 = vmatprep.subr.mxu0 0.0
    %2270 = vmatpush1.msra.mxu0 0.0
    %2271 = vmatprep.subr.mxu0 0.0
    %2272 = vmatpush1.msra.mxu0 0.0
    %2273 = vmatprep.subr.mxu0 0.0
    %2274 = vmatpush1.msra.mxu0 0.0
    %2275 = vmatprep.subr.mxu0 0.0
    %2276 = vmatpush1.msra.mxu0 0.0
    %2277 = vmatprep.subr.mxu0 0.0
    %2278 = vmatpush1.msra.mxu0 0.0
    %2279 = vmatprep.subr.mxu0 0.0
    %2280 = vmatpush1.msra.mxu0 0.0
    %2281 = vmatprep.subr.mxu0 0.0
    %2282 = vmatpush1.msra.mxu0 0.0
    %2283 = vmatprep.subr.mxu0 0.0
    %2284 = vmatpush1.msra.mxu0 0.0
    %2285 = vmatprep.subr.mxu0 0.0
    %2286 = vmatpush1.msra.mxu0 0.0
    %2287 = vmatprep.subr.mxu0 0.0
    %2288 = vmatpush1.msra.mxu0 0.0
    %2289 = vmatprep.subr.mxu0 0.0
    %2290 = vmatpush1.msra.mxu0 0.0
    %2291 = vmatprep.subr.mxu0 0.0
    %2292 = vmatpush1.msra.mxu0 0.0
    %2293 = vmatprep.subr.mxu0 0.0
    %2294 = vmatpush1.msra.mxu0 0.0
    %2295 = vmatprep.subr.mxu0 0.0
    %2296 = vmatpush1.msra.mxu0 0.0
    %2297 = vmatprep.subr.mxu0 0.0
    %2298 = vmatpush1.msra.mxu0 0.0
    %2299 = vmatprep.subr.mxu0 0.0
    %2300 = vmatpush1.msra.mxu0 0.0
    %2301 = vmatprep.subr.mxu0 0.0
    %2302 = vmatpush1.msra.mxu0 0.0
    %2303 = vmatprep.subr.mxu0 0.0
    %2304 = vmatpush1.msra.mxu0 0.0
    %2305 = vmatprep.subr.mxu0 0.0
    %2306 = vmatpush1.msra.mxu0 0.0
    %2307 = vmatprep.subr.mxu0 0.0
    %2308 = vmatpush1.msra.mxu0 0.0
    %2309 = vmatprep.subr.mxu0 0.0
    %2310 = vmatpush1.msra.mxu0 0.0
    %2311 = vmatprep.subr.mxu0 0.0
    %2312 = vmatpush1.msra.mxu0 0.0
    %2313 = vmatprep.mubr.f32.mxu0 0.0
    %2314 = vmatmul.mubr.f32.gmra.mrb[0].mxu0 %v2244
    %v2315 = vpop.f32.mrb[0].mxu0
    %v2316 = vadd.f32 0.0, %v2315
    %v2317 = vpop.f32.mrb[0].mxu0
    %2318 = vmatprep.mubr.f32.mxu0 0.0
    %2319 = vmatmul.mubr.f32.gmra.mrb[0].mxu0 %v2247
    %v2320 = vpop.f32.mrb[0].mxu0
    %v2321 = vadd.f32 0.0, %v2320
    %v2322 = vpop.f32.mrb[0].mxu0
    %2323 = vdwg.mxu0
    %v2324 = vadd.f32 %v2235, %v2316
    %v2325 = vadd.f32 %v2240, %v2321
    %v2327 = vlaneseq
    %v2328 = vshrl.u32 %v2327, 7
    %v2329 = vsub.s32 0, %v2328
    %v2330 = vrot.slane %v2078, %v2329
    %v2332 = vadd.f32 %v2324, %v2330
    %v2333 = vadd.f32 %v2325, %v2330
    %v2335 = vsel %vm352, %v1829, 0
    %2337 = vmatprep.subr.mxu0 0.0
    %2338 = vmatpush1.msra.mxu0 %v2073
    %2339 = vmatprep.subr.mxu0 0.0
    %2340 = vmatpush1.msra.mxu0 %v2074
    %2341 = vmatprep.subr.mxu0 0.0
    %2342 = vmatpush1.msra.mxu0 %v2075
    %2343 = vmatprep.subr.mxu0 0.0
    %2344 = vmatpush1.msra.mxu0 %v2076
    %2345 = vmatprep.subr.mxu0 0.0
    %2346 = vmatpush1.msra.mxu0 0.0
    %2347 = vmatprep.subr.mxu0 0.0
    %2348 = vmatpush1.msra.mxu0 0.0
    %2349 = vmatprep.subr.mxu0 0.0
    %2350 = vmatpush1.msra.mxu0 0.0
    %2351 = vmatprep.subr.mxu0 0.0
    %2352 = vmatpush1.msra.mxu0 0.0
    %2353 = vmatprep.subr.mxu0 0.0
    %2354 = vmatpush1.msra.mxu0 0.0
    %2355 = vmatprep.subr.mxu0 0.0
    %2356 = vmatpush1.msra.mxu0 0.0
    %2357 = vmatprep.subr.mxu0 0.0
    %2358 = vmatpush1.msra.mxu0 0.0
    %2359 = vmatprep.subr.mxu0 0.0
    %2360 = vmatpush1.msra.mxu0 0.0
    %2361 = vmatprep.subr.mxu0 0.0
    %2362 = vmatpush1.msra.mxu0 0.0
    %2363 = vmatprep.subr.mxu0 0.0
    %2364 = vmatpush1.msra.mxu0 0.0
    %2365 = vmatprep.subr.mxu0 0.0
    %2366 = vmatpush1.msra.mxu0 0.0
    %2367 = vmatprep.subr.mxu0 0.0
    %2368 = vmatpush1.msra.mxu0 0.0
    %2369 = vmatprep.subr.mxu0 0.0
    %2370 = vmatpush1.msra.mxu0 0.0
    %2371 = vmatprep.subr.mxu0 0.0
    %2372 = vmatpush1.msra.mxu0 0.0
    %2373 = vmatprep.subr.mxu0 0.0
    %2374 = vmatpush1.msra.mxu0 0.0
    %2375 = vmatprep.subr.mxu0 0.0
    %2376 = vmatpush1.msra.mxu0 0.0
    %2377 = vmatprep.subr.mxu0 0.0
    %2378 = vmatpush1.msra.mxu0 0.0
    %2379 = vmatprep.subr.mxu0 0.0
    %2380 = vmatpush1.msra.mxu0 0.0
    %2381 = vmatprep.subr.mxu0 0.0
    %2382 = vmatpush1.msra.mxu0 0.0
    %2383 = vmatprep.subr.mxu0 0.0
    %2384 = vmatpush1.msra.mxu0 0.0
    %2385 = vmatprep.subr.mxu0 0.0
    %2386 = vmatpush1.msra.mxu0 0.0
    %2387 = vmatprep.subr.mxu0 0.0
    %2388 = vmatpush1.msra.mxu0 0.0
    %2389 = vmatprep.subr.mxu0 0.0
    %2390 = vmatpush1.msra.mxu0 0.0
    %2391 = vmatprep.subr.mxu0 0.0
    %2392 = vmatpush1.msra.mxu0 0.0
    %2393 = vmatprep.subr.mxu0 0.0
    %2394 = vmatpush1.msra.mxu0 0.0
    %2395 = vmatprep.subr.mxu0 0.0
    %2396 = vmatpush1.msra.mxu0 0.0
    %2397 = vmatprep.subr.mxu0 0.0
    %2398 = vmatpush1.msra.mxu0 0.0
    %2399 = vmatprep.subr.mxu0 0.0
    %2400 = vmatpush1.msra.mxu0 0.0
    %2401 = vmatprep.mubr.f32.mxu0 0.0
    %2402 = vmatmul.mubr.f32.gmra.mrb[0].mxu0 %v2335
    %v2403 = vpop.f32.mrb[0].mxu0
    %v2404 = vadd.f32 0.0, %v2403
    %v2405 = vpop.f32.mrb[0].mxu0
    %2406 = vdwg.mxu0
    %v2408 = vsel %vm352, %v2054, 0
    %2410 = vmatprep.subr.mxu0 0.0
    %2411 = vmatpush1.msra.mxu0 %v2069
    %2412 = vmatprep.subr.mxu0 0.0
    %2413 = vmatpush1.msra.mxu0 %v2070
    %2414 = vmatprep.subr.mxu0 0.0
    %2415 = vmatpush1.msra.mxu0 %v2071
    %2416 = vmatprep.subr.mxu0 0.0
    %2417 = vmatpush1.msra.mxu0 %v2072
    %2418 = vmatprep.subr.mxu0 0.0
    %2419 = vmatpush1.msra.mxu0 0.0
    %2420 = vmatprep.subr.mxu0 0.0
    %2421 = vmatpush1.msra.mxu0 0.0
    %2422 = vmatprep.subr.mxu0 0.0
    %2423 = vmatpush1.msra.mxu0 0.0
    %2424 = vmatprep.subr.mxu0 0.0
    %2425 = vmatpush1.msra.mxu0 0.0
    %2426 = vmatprep.subr.mxu0 0.0
    %2427 = vmatpush1.msra.mxu0 0.0
    %2428 = vmatprep.subr.mxu0 0.0
    %2429 = vmatpush1.msra.mxu0 0.0
    %2430 = vmatprep.subr.mxu0 0.0
    %2431 = vmatpush1.msra.mxu0 0.0
    %2432 = vmatprep.subr.mxu0 0.0
    %2433 = vmatpush1.msra.mxu0 0.0
    %2434 = vmatprep.subr.mxu0 0.0
    %2435 = vmatpush1.msra.mxu0 0.0
    %2436 = vmatprep.subr.mxu0 0.0
    %2437 = vmatpush1.msra.mxu0 0.0
    %2438 = vmatprep.subr.mxu0 0.0
    %2439 = vmatpush1.msra.mxu0 0.0
    %2440 = vmatprep.subr.mxu0 0.0
    %2441 = vmatpush1.msra.mxu0 0.0
    %2442 = vmatprep.subr.mxu0 0.0
    %2443 = vmatpush1.msra.mxu0 0.0
    %2444 = vmatprep.subr.mxu0 0.0
    %2445 = vmatpush1.msra.mxu0 0.0
    %2446 = vmatprep.subr.mxu0 0.0
    %2447 = vmatpush1.msra.mxu0 0.0
    %2448 = vmatprep.subr.mxu0 0.0
    %2449 = vmatpush1.msra.mxu0 0.0
    %2450 = vmatprep.subr.mxu0 0.0
    %2451 = vmatpush1.msra.mxu0 0.0
    %2452 = vmatprep.subr.mxu0 0.0
    %2453 = vmatpush1.msra.mxu0 0.0
    %2454 = vmatprep.subr.mxu0 0.0
    %2455 = vmatpush1.msra.mxu0 0.0
    %2456 = vmatprep.subr.mxu0 0.0
    %2457 = vmatpush1.msra.mxu0 0.0
    %2458 = vmatprep.subr.mxu0 0.0
    %2459 = vmatpush1.msra.mxu0 0.0
    %2460 = vmatprep.subr.mxu0 0.0
    %2461 = vmatpush1.msra.mxu0 0.0
    %2462 = vmatprep.subr.mxu0 0.0
    %2463 = vmatpush1.msra.mxu0 0.0
    %2464 = vmatprep.subr.mxu0 0.0
    %2465 = vmatpush1.msra.mxu0 0.0
    %2466 = vmatprep.subr.mxu0 0.0
    %2467 = vmatpush1.msra.mxu0 0.0
    %2468 = vmatprep.subr.mxu0 0.0
    %2469 = vmatpush1.msra.mxu0 0.0
    %2470 = vmatprep.subr.mxu0 0.0
    %2471 = vmatpush1.msra.mxu0 0.0
    %2472 = vmatprep.subr.mxu0 0.0
    %2473 = vmatpush1.msra.mxu0 0.0
    %2474 = vmatprep.mubr.f32.mxu0 0.0
    %2475 = vmatmul.mubr.f32.gmra.mrb[0].mxu0 %v2408
    %v2476 = vpop.f32.mrb[0].mxu0
    %v2477 = vadd.f32 %v2404, %v2476
    %v2478 = vpop.f32.mrb[0].mxu0
    %2479 = vdwg.mxu0
    %v2481 = vlaneseq
    %v2482 = vshrl.u32 %v2481, 7
    %v2483 = vsub.s32 0, %v2482
    %v2484 = vrot.slane %v2080, %v2483
    %v2486 = vadd.f32 %v2477, %v2484
    %v2487 = vmax.f32 %v1264, %v2332
    %v2488 = vmax.f32 %v1265, %v2333
    %v2489 = vmax.f32 %v1418, %v2486
    %2490 = vst.msk [vmem:[#allocation2] sm:$0xff] %vm352, %v2487
    %2491 = vst.msk [vmem:[#allocation2 + $0x8] sm:$0xff] %vm352, %v2488
    %2492 = vst.msk [vmem:[#allocation4] sm:$0xff] %vm352, %v2489
    // Predicated region
    $region50: #{tpu_custom_call.1} parent=1 // pred_check
      _
    $region51: #{tpu_custom_call.1} parent=1 // pred_check_branch
      %2494 = sbr.rel (0) target = $region53
    $region52: #{tpu_custom_call.1} parent=1 // pred_region
      %s2496 = ssub.s32 256, 256
      %2497 = vsyncadd [#allocation3], %s2496
      %s2498 = sshll.u32 [#allocation2], 4
      %s2499 = int_to_ptr.vmem [resolvable:$true] %s2498
      %2504 = dma.vmem_to_hbm [thread:$0]  %s2499, 256, %s12, [#allocation3], 128, 128, 8
    $region53: #{tpu_custom_call.1} parent=1 // pred_fallthru
      _
    // Predicated region
    $region54: #{tpu_custom_call.1} parent=1 // pred_check
      _
    $region55: #{tpu_custom_call.1} parent=1 // pred_check_branch
      %2506 = sbr.rel (0) target = $region57
    $region56: #{tpu_custom_call.1} parent=1 // pred_region
      %s2508 = ssub.s32 128, 128
      %2509 = vsyncadd [#allocation5], %s2508
      %s2511 = sshll.u32 [#allocation4], 4
      %s2512 = int_to_ptr.vmem [resolvable:$true] %s2511
      %2514 = dma.vmem_to_hbm [thread:$0]  %s2512, 128, %s13, [#allocation5]
    $region57: #{tpu_custom_call.1} parent=1 // pred_fallthru
      _
    // Predicated region
    $region58: #{tpu_custom_call.1} parent=1 // pred_check
      _
    $region59: #{tpu_custom_call.1} parent=1 // pred_check_branch
      %2516 = sbr.rel (0) target = $region61
    $region60: #{tpu_custom_call.1} parent=1 // pred_region
      %2517 = dma.done [#allocation3], 256
    $region61: #{tpu_custom_call.1} parent=1 // pred_fallthru
      _
    // Predicated region
    $region62: #{tpu_custom_call.1} parent=1 // pred_check
      _
    $region63: #{tpu_custom_call.1} parent=1 // pred_check_branch
      %2519 = sbr.rel (0) target = $region65
    $region64: #{tpu_custom_call.1} parent=1 // pred_region
      %2520 = dma.done [#allocation5], 128
    $region65: #{tpu_custom_call.1} parent=1 // pred_fallthru
      _
    %2521 = vsyncpa [#allocation3], 1
    %2522 = vsyncpa [#allocation5], 1

</llo_original>
